<compile_context>
chip_gen: v6e
topology: v6e:2x2x1
jax: 0.10.0
libtpu: 0.0.40
codegen_flags: <defaults>
</compile_context>

<pallas_src>
import functools

import jax
import jax.numpy as jnp
from jax.experimental import pallas as pl
from jax.experimental.pallas import tpu as pltpu

VMEM_SPEC = pl.BlockSpec(memory_space=pltpu.MemorySpace.VMEM)


# ------------------------- fused BERT encoder kernel -------------------------

def _encoder_kernel(x_ref, bias_ref,
                    emb_g_ref, emb_b_ref,
                    wqkv_ref, bqkv_ref, wo_ref, bo_ref,
                    wi_ref, bi_ref, wf_ref, bf_ref,
                    ln1_g_ref, ln1_b_ref, ln2_g_ref, ln2_b_ref,
                    o_ref, *, n_layers, n_heads, eps, scale):
    L, H = x_ref.shape[1], x_ref.shape[2]
    dh = H // n_heads

    def layernorm(v, g, b):
        mu = jnp.mean(v, axis=-1, keepdims=True)
        vc = v - mu
        var = jnp.mean(vc * vc, axis=-1, keepdims=True)
        return vc * jax.lax.rsqrt(var + eps) * g + b

    x = x_ref[0]                              # (L, H) f32, one example
    attn_bias = bias_ref[0]                   # (1, L) f32 additive key mask

    # lane index used to build per-head masks (avoids lane slicing/reshape)
    lane = jax.lax.broadcasted_iota(jnp.int32, (1, H), 1)

    # embedding LayerNorm
    x = layernorm(x, emb_g_ref[...], emb_b_ref[...])

    for layer in range(n_layers):             # static unroll over layers
        xb = x.astype(jnp.bfloat16)
        q = jnp.dot(xb, wqkv_ref[layer, 0],
                    preferred_element_type=jnp.float32) + bqkv_ref[layer, 0]
        k = jnp.dot(xb, wqkv_ref[layer, 1],
                    preferred_element_type=jnp.float32) + bqkv_ref[layer, 1]
        v = jnp.dot(xb, wqkv_ref[layer, 2],
                    preferred_element_type=jnp.float32) + bqkv_ref[layer, 2]
        kb = k.astype(jnp.bfloat16)

        # multi-head attention via head lane-masks; no HBM round trip,
        # no transposes.
        ctx = jnp.zeros((L, H), jnp.float32)
        for h in range(n_heads):
            hm = jnp.logical_and(lane >= h * dh, lane < (h + 1) * dh)
            hm = hm.astype(jnp.float32)                        # (1, H) 0/1
            qh = (q * hm).astype(jnp.bfloat16)                 # zeros off-head
            s = jax.lax.dot_general(qh, kb, (((1,), (1,)), ((), ())),
                                    preferred_element_type=jnp.float32)
            s = s * scale + attn_bias                          # (L, L)
            m = jnp.max(s, axis=-1, keepdims=True)
            e = jnp.exp(s - m)
            p = e * pl.reciprocal(jnp.sum(e, axis=-1, keepdims=True),
                                  approx=True)
            vh = (v * hm).astype(jnp.bfloat16)                 # zeros off-head
            ctx = ctx + jnp.dot(p.astype(jnp.bfloat16), vh,
                                preferred_element_type=jnp.float32)

        attn = jnp.dot(ctx.astype(jnp.bfloat16), wo_ref[layer],
                       preferred_element_type=jnp.float32) + bo_ref[layer]
        x = layernorm(x + attn, ln1_g_ref[layer], ln1_b_ref[layer])

        inter = jnp.dot(x.astype(jnp.bfloat16), wi_ref[layer],
                        preferred_element_type=jnp.float32) + bi_ref[layer]
        # TODO(synk): HF/PyTorch BERT uses exact erf GELU; tanh approx here.
        inter = jax.nn.gelu(inter, approximate=True)
        ffn = jnp.dot(inter.astype(jnp.bfloat16), wf_ref[layer],
                      preferred_element_type=jnp.float32) + bf_ref[layer]
        x = layernorm(x + ffn, ln2_g_ref[layer], ln2_b_ref[layer])

    o_ref[0] = x


def pallas_bert_encoder(params, token_ids, mask, cfg):
    Bt, L = token_ids.shape
    H, nh, n_layers = cfg["hidden"], cfg["heads"], cfg["layers"]
    dh = H // nh
    scale = 1.0 / float(dh) ** 0.5

    # embedding lookup stays in XLA (gather); everything else is in-kernel.
    emb = (jnp.take(params["word_emb"], token_ids, axis=0)
           + params["pos_emb"][:L][None, :, :]
           + params["type_emb"][0][None, None, :])
    # TODO(synk): no token_type_ids plumbing; segment 0 used for text & gloss.
    attn_bias = ((1.0 - mask.astype(jnp.float32)) * -10000.0).reshape(Bt, 1, L)

    # bf16 for matmul weights (MXU + half DMA bytes); biases/LN params in f32.
    weights = [params["emb_ln_g"], params["emb_ln_b"],
               params["wqkv"].astype(jnp.bfloat16), params["bqkv"],
               params["wo"].astype(jnp.bfloat16), params["bo"],
               params["wi"].astype(jnp.bfloat16), params["bi"],
               params["wf"].astype(jnp.bfloat16), params["bf"],
               params["ln1_g"], params["ln1_b"],
               params["ln2_g"], params["ln2_b"]]

    def resident(a):
        nd = a.ndim
        return pl.BlockSpec(a.shape, lambda b, _nd=nd: (0,) * _nd)

    in_specs = ([pl.BlockSpec((1, L, H), lambda b: (b, 0, 0)),
                 pl.BlockSpec((1, 1, L), lambda b: (b, 0, 0))]
                + [resident(a) for a in weights])

    return pl.pallas_call(
        functools.partial(_encoder_kernel, n_layers=n_layers, n_heads=nh,
                          eps=1e-12, scale=scale),
        out_shape=jax.ShapeDtypeStruct((Bt, L, H), jnp.float32),
        grid=(Bt,),
        in_specs=in_specs,
        out_specs=pl.BlockSpec((1, L, H), lambda b: (b, 0, 0)),
        compiler_params=pltpu.CompilerParams(
            dimension_semantics=("parallel",)),
    )(emb, attn_bias, *weights)


# --------------------- WSD mean-pool / scoring / CE kernel -------------------

def _wsd_score_kernel(text_ref, gloss_ref, start_ref, end_ref, nsense_ref,
                      label_ref, score_ref, loss_ref):
    # text:  (B, L, H)   gloss: (B, Smax, H)
    # start/end/nsense/label: (B, 1) int32
    text = text_ref[...]
    gloss = gloss_ref[...]
    start = start_ref[...]
    end = end_ref[...]
    nsense = nsense_ref[...]
    labels = label_ref[...]

    B, L, _ = text.shape
    smax = gloss.shape[1]

    # mean over text_output[start:end] (exclusive end), per example
    pos = jax.lax.broadcasted_iota(jnp.int32, (B, L), 1)
    sel = jnp.logical_and(pos >= start, pos < end).astype(jnp.float32)  # (B, L)
    denom = jnp.maximum((end - start).astype(jnp.float32), 1.0)         # guard
    w = jnp.sum(text * sel[:, :, None], axis=1) / denom                 # (B, H)

    # score[i, s] = <gloss_cls[i, s], w[i]>
    scores = jnp.sum(gloss * w[:, None, :], axis=-1)                    # (B, Smax)

    # mask padded candidate senses
    sidx = jax.lax.broadcasted_iota(jnp.int32, (B, smax), 1)
    scores = jnp.where(sidx < nsense, scores, jnp.float32(-1e30))
    score_ref[...] = scores

    # per-example cross-entropy loss
    m = jnp.max(scores, axis=-1, keepdims=True)
    lse = m + jnp.log(jnp.sum(jnp.exp(scores - m), axis=-1, keepdims=True))
    picked = jnp.sum(jnp.where(sidx == labels, scores, 0.0),
                     axis=-1, keepdims=True)
    loss_ref[...] = lse - picked


def pallas_wsd_score(text_out, gloss_padded, start_locs, end_locs, nsense, labels):
    B, smax, _ = gloss_padded.shape
    return pl.pallas_call(
        _wsd_score_kernel,
        out_shape=(jax.ShapeDtypeStruct((B, smax), jnp.float32),
                   jax.ShapeDtypeStruct((B, 1), jnp.float32)),
        in_specs=[VMEM_SPEC] * 6,
        out_specs=(VMEM_SPEC, VMEM_SPEC),
    )(text_out, gloss_padded,
      start_locs.reshape(B, 1).astype(jnp.int32),
      end_locs.reshape(B, 1).astype(jnp.int32),
      nsense.reshape(B, 1).astype(jnp.int32),
      labels.reshape(B, 1).astype(jnp.int32))


# ------------------------------ parameters -----------------------------------

def init_bert_params(key, cfg):
    H, I, NL = cfg["hidden"], cfg["intermediate"], cfg["layers"]

    def nrm(k, shape):
        return 0.02 * jax.random.normal(k, shape, jnp.float32)

    keys = jax.random.split(key, 7)
    return {
        "word_emb": nrm(keys[0], (cfg["vocab"], H)),
        "pos_emb": nrm(keys[1], (cfg["max_pos"], H)),
        "type_emb": nrm(keys[2], (2, H)),
        "emb_ln_g": jnp.ones((1, H), jnp.float32),
        "emb_ln_b": jnp.zeros((1, H), jnp.float32),
        # stacked per-layer weights (single ref / single DMA per tensor)
        "wqkv": nrm(keys[3], (NL, 3, H, H)),
        "bqkv": jnp.zeros((NL, 3, H), jnp.float32),
        "wo": nrm(keys[4], (NL, H, H)),
        "bo": jnp.zeros((NL, H), jnp.float32),
        "wi": nrm(keys[5], (NL, H, I)),
        "bi": jnp.zeros((NL, I), jnp.float32),
        "wf": nrm(keys[6], (NL, I, H)),
        "bf": jnp.zeros((NL, H), jnp.float32),
        "ln1_g": jnp.ones((NL, H), jnp.float32),
        "ln1_b": jnp.zeros((NL, H), jnp.float32),
        "ln2_g": jnp.ones((NL, H), jnp.float32),
        "ln2_b": jnp.zeros((NL, H), jnp.float32),
    }


# --------------------- BertForWSD_Siamse.forward (JAX) -----------------------

def bert_for_wsd_siamse_forward(params, cfg, sent_token_ids, sent_mask_ids,
                                start_locs, end_locs,
                                sense_token_ids_list, sense_mask_ids_list,
                                labels=None):
    candidate_sense_nums = [int(s.shape[0]) for s in sense_token_ids_list]
    first_sense_locs = []
    curr = 0
    for n in candidate_sense_nums:
        first_sense_locs.append(curr)
        curr += n
    n_total_senses = curr

    all_sense_token_ids = jnp.concatenate(sense_token_ids_list, axis=0)
    all_sense_mask_ids = jnp.concatenate(sense_mask_ids_list, axis=0)

    B, L = sent_token_ids.shape
    H = cfg["hidden"]

    # single batched encoder pass over text + all gloss sequences
    tok = jnp.concatenate([sent_token_ids, all_sense_token_ids], axis=0)
    msk = jnp.concatenate([sent_mask_ids, all_sense_mask_ids], axis=0)
    enc = pallas_bert_encoder(params, tok, msk, cfg)        # (B + N, L, H)
    text_out = enc[:B]                                      # (B, L, H)
    gloss_cls = enc[B:, 0, :]                               # (N, H)

    # pack ragged gloss [CLS] rows into (B, Smax, H) with ONE gather
    smax = max(candidate_sense_nums)
    first = jnp.array(first_sense_locs, jnp.int32)          # (B,)
    row_idx = jnp.clip(first[:, None]
                       + jnp.arange(smax, dtype=jnp.int32)[None, :],
                       0, n_total_senses - 1)               # (B, Smax)
    gloss_padded = jnp.take(gloss_cls, row_idx.reshape(-1),
                            axis=0).reshape(B, smax, H)

    nsense = jnp.array(candidate_sense_nums, jnp.int32)
    lbl = labels if labels is not None else jnp.zeros((B,), jnp.int32)

    scores, losses = pallas_wsd_score(text_out, gloss_padded,
                                      start_locs, end_locs, nsense, lbl)

    score_list = [scores[i:i + 1, :candidate_sense_nums[i]] for i in range(B)]
    if labels is not None:
        total_loss = jnp.mean(losses)   # mean of per-example CE losses
        return total_loss, score_list
    return score_list


# ----------------------------------- main -----------------------------------

if __name__ == "__main__":
    cfg = dict(hidden=32, heads=2, layers=2, intermediate=64,
               vocab=64, max_pos=16)
    B, L = 2, 8

    root = jax.random.PRNGKey(0)
    kp, k1, k2, k3 = jax.random.split(root, 4)
    params = init_bert_params(kp, cfg)

    sent_token_ids = jax.random.randint(k1, (B, L), 0, cfg["vocab"], jnp.int32)
    sent_mask_ids = jnp.ones((B, L), jnp.int32)
    start_locs = jnp.array([1, 2], jnp.int32)
    end_locs = jnp.array([3, 5], jnp.int32)

    # ragged candidate-sense lists: example 0 has 3 senses, example 1 has 2
    sense_token_ids_list = [
        jax.random.randint(k2, (3, L), 0, cfg["vocab"], jnp.int32),
        jax.random.randint(k3, (2, L), 0, cfg["vocab"], jnp.int32),
    ]
    sense_mask_ids_list = [
        jnp.ones((3, L), jnp.int32),
        jnp.ones((2, L), jnp.int32),
    ]
    labels = jnp.array([1, 0], jnp.int32)

    total_loss, score_list = bert_for_wsd_siamse_forward(
        params, cfg, sent_token_ids, sent_mask_ids, start_locs, end_locs,
        sense_token_ids_list, sense_mask_ids_list, labels=labels)

    jax.block_until_ready(total_loss)
    for s in score_list:
        jax.block_until_ready(s)

    print("KERNEL_OK")
</pallas_src>

<mosaic_0001>
module attributes {stable_mosaic.version = 11 : i64} {
  func.func @_encoder_kernel(%arg0: i32, %arg1: memref<1x8x32xf32, #tpu.memory_space<vmem>>, %arg2: memref<1x1x8xf32, #tpu.memory_space<vmem>>, %arg3: memref<1x32xf32, #tpu.memory_space<vmem>>, %arg4: memref<1x32xf32, #tpu.memory_space<vmem>>, %arg5: memref<2x3x32x32xbf16, #tpu.memory_space<vmem>>, %arg6: memref<2x3x32xf32, #tpu.memory_space<vmem>>, %arg7: memref<2x32x32xbf16, #tpu.memory_space<vmem>>, %arg8: memref<2x32xf32, #tpu.memory_space<vmem>>, %arg9: memref<2x32x64xbf16, #tpu.memory_space<vmem>>, %arg10: memref<2x64xf32, #tpu.memory_space<vmem>>, %arg11: memref<2x64x32xbf16, #tpu.memory_space<vmem>>, %arg12: memref<2x32xf32, #tpu.memory_space<vmem>>, %arg13: memref<2x32xf32, #tpu.memory_space<vmem>>, %arg14: memref<2x32xf32, #tpu.memory_space<vmem>>, %arg15: memref<2x32xf32, #tpu.memory_space<vmem>>, %arg16: memref<2x32xf32, #tpu.memory_space<vmem>>, %arg17: memref<1x8x32xf32, #tpu.memory_space<vmem>>) attributes {dimension_semantics = [#tpu.dimension_semantics<parallel>], iteration_bounds = array<i64: 7>, scalar_prefetch = 0 : i64, scratch_operands = 0 : i64, tpu.core_type = #tpu.core_type<tc>, window_params = [{transform_indices = @transform_0, window_bounds = array<i64: 1, 8, 32>}, {transform_indices = @transform_1, window_bounds = array<i64: 1, 1, 8>}, {pipeline_mode = #tpu.pipeline_mode<synchronous>, transform_indices = @transform_2, window_bounds = array<i64: 1, 32>}, {pipeline_mode = #tpu.pipeline_mode<synchronous>, transform_indices = @transform_3, window_bounds = array<i64: 1, 32>}, {pipeline_mode = #tpu.pipeline_mode<synchronous>, transform_indices = @transform_4, window_bounds = array<i64: 2, 3, 32, 32>}, {pipeline_mode = #tpu.pipeline_mode<synchronous>, transform_indices = @transform_5, window_bounds = array<i64: 2, 3, 32>}, {pipeline_mode = #tpu.pipeline_mode<synchronous>, transform_indices = @transform_6, window_bounds = array<i64: 2, 32, 32>}, {pipeline_mode = #tpu.pipeline_mode<synchronous>, transform_indices = @transform_7, window_bounds = array<i64: 2, 32>}, {pipeline_mode = #tpu.pipeline_mode<synchronous>, transform_indices = @transform_8, window_bounds = array<i64: 2, 32, 64>}, {pipeline_mode = #tpu.pipeline_mode<synchronous>, transform_indices = @transform_9, window_bounds = array<i64: 2, 64>}, {pipeline_mode = #tpu.pipeline_mode<synchronous>, transform_indices = @transform_10, window_bounds = array<i64: 2, 64, 32>}, {pipeline_mode = #tpu.pipeline_mode<synchronous>, transform_indices = @transform_11, window_bounds = array<i64: 2, 32>}, {pipeline_mode = #tpu.pipeline_mode<synchronous>, transform_indices = @transform_12, window_bounds = array<i64: 2, 32>}, {pipeline_mode = #tpu.pipeline_mode<synchronous>, transform_indices = @transform_13, window_bounds = array<i64: 2, 32>}, {pipeline_mode = #tpu.pipeline_mode<synchronous>, transform_indices = @transform_14, window_bounds = array<i64: 2, 32>}, {pipeline_mode = #tpu.pipeline_mode<synchronous>, transform_indices = @transform_15, window_bounds = array<i64: 2, 32>}, {transform_indices = @transform_16, window_bounds = array<i64: 1, 8, 32>}]} {
    %c0 = arith.constant 0 : index
    %c0_0 = arith.constant 0 : index
    %c0_1 = arith.constant 0 : index
    %0 = vector.load %arg1[%c0, %c0_0, %c0_1] : memref<1x8x32xf32, #tpu.memory_space<vmem>>, vector<1x8x32xf32>
    %1 = vector.shape_cast %0 : vector<1x8x32xf32> to vector<8x32xf32>
    %c0_2 = arith.constant 0 : index
    %c0_3 = arith.constant 0 : index
    %c0_4 = arith.constant 0 : index
    %2 = vector.load %arg2[%c0_2, %c0_3, %c0_4] : memref<1x1x8xf32, #tpu.memory_space<vmem>>, vector<1x1x8xf32>
    %3 = vector.shape_cast %2 : vector<1x1x8xf32> to vector<1x8xf32>
    %4 = tpu.iota {dimensions = array<i32: 1>} : vector<1x32xi32>
    %c0_5 = arith.constant 0 : index
    %c0_6 = arith.constant 0 : index
    %5 = vector.load %arg3[%c0_5, %c0_6] : memref<1x32xf32, #tpu.memory_space<vmem>>, vector<1x32xf32>
    %c0_7 = arith.constant 0 : index
    %c0_8 = arith.constant 0 : index
    %6 = vector.load %arg4[%c0_7, %c0_8] : memref<1x32xf32, #tpu.memory_space<vmem>>, vector<1x32xf32>
    %cst = arith.constant dense<0.000000e+00> : vector<8xf32>
    %7 = vector.multi_reduction <add>, %1, %cst [1] : vector<8x32xf32> to vector<8xf32>
    %8 = vector.shape_cast %7 : vector<8xf32> to vector<8x1xf32>
    %cst_9 = arith.constant 3.200000e+01 : f32
    %9 = vector.broadcast %cst_9 : f32 to vector<8x1xf32>
    %10 = arith.divf %8, %9 : vector<8x1xf32>
    %11 = vector.broadcast %10 : vector<8x1xf32> to vector<8x32xf32>
    %12 = arith.subf %1, %11 : vector<8x32xf32>
    %13 = arith.mulf %12, %12 : vector<8x32xf32>
    %cst_10 = arith.constant dense<0.000000e+00> : vector<8xf32>
    %14 = vector.multi_reduction <add>, %13, %cst_10 [1] : vector<8x32xf32> to vector<8xf32>
    %15 = vector.shape_cast %14 : vector<8xf32> to vector<8x1xf32>
    %cst_11 = arith.constant 3.200000e+01 : f32
    %16 = vector.broadcast %cst_11 : f32 to vector<8x1xf32>
    %17 = arith.divf %15, %16 : vector<8x1xf32>
    %cst_12 = arith.constant 9.99999996E-13 : f32
    %18 = vector.broadcast %cst_12 : f32 to vector<8x1xf32>
    %19 = arith.addf %17, %18 : vector<8x1xf32>
    %20 = math.rsqrt %19 : vector<8x1xf32>
    %21 = vector.broadcast %20 : vector<8x1xf32> to vector<8x32xf32>
    %22 = arith.mulf %12, %21 : vector<8x32xf32>
    %23 = vector.broadcast %5 : vector<1x32xf32> to vector<8x32xf32>
    %24 = arith.mulf %22, %23 : vector<8x32xf32>
    %25 = vector.broadcast %6 : vector<1x32xf32> to vector<8x32xf32>
    %26 = arith.addf %24, %25 : vector<8x32xf32>
    %27 = arith.truncf %26 : vector<8x32xf32> to vector<8x32xbf16>
    %c0_13 = arith.constant 0 : index
    %c0_14 = arith.constant 0 : index
    %c0_15 = arith.constant 0 : index
    %c0_16 = arith.constant 0 : index
    %28 = vector.load %arg5[%c0_13, %c0_14, %c0_15, %c0_16] : memref<2x3x32x32xbf16, #tpu.memory_space<vmem>>, vector<1x1x32x32xbf16>
    %29 = vector.shape_cast %28 : vector<1x1x32x32xbf16> to vector<32x32xbf16>
    %cst_17 = arith.constant dense<0.000000e+00> : vector<8x32xf32>
    %30 = tpu.matmul %27, %29, %cst_17 {dimension_numbers = #tpu.dot_dimension_numbers<[1], [0], [0], [1], [0, 0, 1, 1], [], []>} : vector<8x32xbf16>, vector<32x32xbf16>, vector<8x32xf32> -> vector<8x32xf32>
    %c0_18 = arith.constant 0 : index
    %c0_19 = arith.constant 0 : index
    %c0_20 = arith.constant 0 : index
    %31 = vector.load %arg6[%c0_18, %c0_19, %c0_20] : memref<2x3x32xf32, #tpu.memory_space<vmem>>, vector<1x1x32xf32>
    %32 = vector.shape_cast %31 : vector<1x1x32xf32> to vector<32xf32>
    %33 = vector.shape_cast %32 : vector<32xf32> to vector<1x32xf32>
    %34 = vector.broadcast %33 : vector<1x32xf32> to vector<8x32xf32>
    %35 = arith.addf %30, %34 : vector<8x32xf32>
    %c0_21 = arith.constant 0 : index
    %c1 = arith.constant 1 : index
    %c0_22 = arith.constant 0 : index
    %c0_23 = arith.constant 0 : index
    %36 = vector.load %arg5[%c0_21, %c1, %c0_22, %c0_23] : memref<2x3x32x32xbf16, #tpu.memory_space<vmem>>, vector<1x1x32x32xbf16>
    %37 = vector.shape_cast %36 : vector<1x1x32x32xbf16> to vector<32x32xbf16>
    %cst_24 = arith.constant dense<0.000000e+00> : vector<8x32xf32>
    %38 = tpu.matmul %27, %37, %cst_24 {dimension_numbers = #tpu.dot_dimension_numbers<[1], [0], [0], [1], [0, 0, 1, 1], [], []>} : vector<8x32xbf16>, vector<32x32xbf16>, vector<8x32xf32> -> vector<8x32xf32>
    %c0_25 = arith.constant 0 : index
    %c1_26 = arith.constant 1 : index
    %c0_27 = arith.constant 0 : index
    %39 = vector.load %arg6[%c0_25, %c1_26, %c0_27] : memref<2x3x32xf32, #tpu.memory_space<vmem>>, vector<1x1x32xf32>
    %40 = vector.shape_cast %39 : vector<1x1x32xf32> to vector<32xf32>
    %41 = vector.shape_cast %40 : vector<32xf32> to vector<1x32xf32>
    %42 = vector.broadcast %41 : vector<1x32xf32> to vector<8x32xf32>
    %43 = arith.addf %38, %42 : vector<8x32xf32>
    %c0_28 = arith.constant 0 : index
    %c2 = arith.constant 2 : index
    %c0_29 = arith.constant 0 : index
    %c0_30 = arith.constant 0 : index
    %44 = vector.load %arg5[%c0_28, %c2, %c0_29, %c0_30] : memref<2x3x32x32xbf16, #tpu.memory_space<vmem>>, vector<1x1x32x32xbf16>
    %45 = vector.shape_cast %44 : vector<1x1x32x32xbf16> to vector<32x32xbf16>
    %cst_31 = arith.constant dense<0.000000e+00> : vector<8x32xf32>
    %46 = tpu.matmul %27, %45, %cst_31 {dimension_numbers = #tpu.dot_dimension_numbers<[1], [0], [0], [1], [0, 0, 1, 1], [], []>} : vector<8x32xbf16>, vector<32x32xbf16>, vector<8x32xf32> -> vector<8x32xf32>
    %c0_32 = arith.constant 0 : index
    %c2_33 = arith.constant 2 : index
    %c0_34 = arith.constant 0 : index
    %47 = vector.load %arg6[%c0_32, %c2_33, %c0_34] : memref<2x3x32xf32, #tpu.memory_space<vmem>>, vector<1x1x32xf32>
    %48 = vector.shape_cast %47 : vector<1x1x32xf32> to vector<32xf32>
    %49 = vector.shape_cast %48 : vector<32xf32> to vector<1x32xf32>
    %50 = vector.broadcast %49 : vector<1x32xf32> to vector<8x32xf32>
    %51 = arith.addf %46, %50 : vector<8x32xf32>
    %52 = arith.truncf %43 : vector<8x32xf32> to vector<8x32xbf16>
    %cst_35 = arith.constant 0.000000e+00 : f32
    %53 = vector.broadcast %cst_35 : f32 to vector<8x32xf32>
    %c0_i32 = arith.constant 0 : i32
    %54 = vector.broadcast %c0_i32 : i32 to vector<1x32xi32>
    %55 = arith.cmpi sge, %4, %54 : vector<1x32xi32>
    %c16_i32 = arith.constant 16 : i32
    %56 = vector.broadcast %c16_i32 : i32 to vector<1x32xi32>
    %57 = arith.cmpi slt, %4, %56 : vector<1x32xi32>
    %58 = arith.andi %55, %57 : vector<1x32xi1>
    %59 = arith.extui %58 : vector<1x32xi1> to vector<1x32xi32>
    %60 = arith.sitofp %59 : vector<1x32xi32> to vector<1x32xf32>
    %61 = vector.broadcast %60 : vector<1x32xf32> to vector<8x32xf32>
    %62 = arith.mulf %35, %61 : vector<8x32xf32>
    %63 = arith.truncf %62 : vector<8x32xf32> to vector<8x32xbf16>
    %cst_36 = arith.constant dense<0.000000e+00> : vector<8x8xf32>
    %64 = tpu.matmul %63, %52, %cst_36 {dimension_numbers = #tpu.dot_dimension_numbers<[1], [1], [0], [0], [0, 0, 1, 0], [], []>} : vector<8x32xbf16>, vector<8x32xbf16>, vector<8x8xf32> -> vector<8x8xf32>
    %cst_37 = arith.constant 2.500000e-01 : f32
    %65 = vector.broadcast %cst_37 : f32 to vector<8x8xf32>
    %66 = arith.mulf %64, %65 : vector<8x8xf32>
    %67 = vector.broadcast %3 : vector<1x8xf32> to vector<8x8xf32>
    %68 = arith.addf %66, %67 : vector<8x8xf32>
    %cst_38 = arith.constant dense<0xFF800000> : vector<8xf32>
    %69 = vector.multi_reduction <maximumf>, %68, %cst_38 [1] : vector<8x8xf32> to vector<8xf32>
    %70 = vector.shape_cast %69 : vector<8xf32> to vector<8x1xf32>
    %71 = vector.broadcast %70 : vector<8x1xf32> to vector<8x8xf32>
    %72 = arith.subf %68, %71 : vector<8x8xf32>
    %73 = math.exp %72 : vector<8x8xf32>
    %cst_39 = arith.constant dense<0.000000e+00> : vector<8xf32>
    %74 = vector.multi_reduction <add>, %73, %cst_39 [1] : vector<8x8xf32> to vector<8xf32>
    %75 = vector.shape_cast %74 : vector<8xf32> to vector<8x1xf32>
    %76 = tpu.reciprocal %75 {approx = true} : vector<8x1xf32> -> vector<8x1xf32>
    %77 = vector.broadcast %76 : vector<8x1xf32> to vector<8x8xf32>
    %78 = arith.mulf %73, %77 : vector<8x8xf32>
    %79 = vector.broadcast %60 : vector<1x32xf32> to vector<8x32xf32>
    %80 = arith.mulf %51, %79 : vector<8x32xf32>
    %81 = arith.truncf %80 : vector<8x32xf32> to vector<8x32xbf16>
    %82 = arith.truncf %78 : vector<8x8xf32> to vector<8x8xbf16>
    %cst_40 = arith.constant dense<0.000000e+00> : vector<8x32xf32>
    %83 = tpu.matmul %82, %81, %cst_40 {dimension_numbers = #tpu.dot_dimension_numbers<[1], [0], [0], [1], [0, 0, 1, 1], [], []>} : vector<8x8xbf16>, vector<8x32xbf16>, vector<8x32xf32> -> vector<8x32xf32>
    %84 = arith.addf %53, %83 : vector<8x32xf32>
    %c16_i32_41 = arith.constant 16 : i32
    %85 = vector.broadcast %c16_i32_41 : i32 to vector<1x32xi32>
    %86 = arith.cmpi sge, %4, %85 : vector<1x32xi32>
    %c32_i32 = arith.constant 32 : i32
    %87 = vector.broadcast %c32_i32 : i32 to vector<1x32xi32>
    %88 = arith.cmpi slt, %4, %87 : vector<1x32xi32>
    %89 = arith.andi %86, %88 : vector<1x32xi1>
    %90 = arith.extui %89 : vector<1x32xi1> to vector<1x32xi32>
    %91 = arith.sitofp %90 : vector<1x32xi32> to vector<1x32xf32>
    %92 = vector.broadcast %91 : vector<1x32xf32> to vector<8x32xf32>
    %93 = arith.mulf %35, %92 : vector<8x32xf32>
    %94 = arith.truncf %93 : vector<8x32xf32> to vector<8x32xbf16>
    %cst_42 = arith.constant dense<0.000000e+00> : vector<8x8xf32>
    %95 = tpu.matmul %94, %52, %cst_42 {dimension_numbers = #tpu.dot_dimension_numbers<[1], [1], [0], [0], [0, 0, 1, 0], [], []>} : vector<8x32xbf16>, vector<8x32xbf16>, vector<8x8xf32> -> vector<8x8xf32>
    %cst_43 = arith.constant 2.500000e-01 : f32
    %96 = vector.broadcast %cst_43 : f32 to vector<8x8xf32>
    %97 = arith.mulf %95, %96 : vector<8x8xf32>
    %98 = vector.broadcast %3 : vector<1x8xf32> to vector<8x8xf32>
    %99 = arith.addf %97, %98 : vector<8x8xf32>
    %cst_44 = arith.constant dense<0xFF800000> : vector<8xf32>
    %100 = vector.multi_reduction <maximumf>, %99, %cst_44 [1] : vector<8x8xf32> to vector<8xf32>
    %101 = vector.shape_cast %100 : vector<8xf32> to vector<8x1xf32>
    %102 = vector.broadcast %101 : vector<8x1xf32> to vector<8x8xf32>
    %103 = arith.subf %99, %102 : vector<8x8xf32>
    %104 = math.exp %103 : vector<8x8xf32>
    %cst_45 = arith.constant dense<0.000000e+00> : vector<8xf32>
    %105 = vector.multi_reduction <add>, %104, %cst_45 [1] : vector<8x8xf32> to vector<8xf32>
    %106 = vector.shape_cast %105 : vector<8xf32> to vector<8x1xf32>
    %107 = tpu.reciprocal %106 {approx = true} : vector<8x1xf32> -> vector<8x1xf32>
    %108 = vector.broadcast %107 : vector<8x1xf32> to vector<8x8xf32>
    %109 = arith.mulf %104, %108 : vector<8x8xf32>
    %110 = vector.broadcast %91 : vector<1x32xf32> to vector<8x32xf32>
    %111 = arith.mulf %51, %110 : vector<8x32xf32>
    %112 = arith.truncf %111 : vector<8x32xf32> to vector<8x32xbf16>
    %113 = arith.truncf %109 : vector<8x8xf32> to vector<8x8xbf16>
    %cst_46 = arith.constant dense<0.000000e+00> : vector<8x32xf32>
    %114 = tpu.matmul %113, %112, %cst_46 {dimension_numbers = #tpu.dot_dimension_numbers<[1], [0], [0], [1], [0, 0, 1, 1], [], []>} : vector<8x8xbf16>, vector<8x32xbf16>, vector<8x32xf32> -> vector<8x32xf32>
    %115 = arith.addf %84, %114 : vector<8x32xf32>
    %116 = arith.truncf %115 : vector<8x32xf32> to vector<8x32xbf16>
    %c0_47 = arith.constant 0 : index
    %c0_48 = arith.constant 0 : index
    %c0_49 = arith.constant 0 : index
    %117 = vector.load %arg7[%c0_47, %c0_48, %c0_49] : memref<2x32x32xbf16, #tpu.memory_space<vmem>>, vector<1x32x32xbf16>
    %118 = vector.shape_cast %117 : vector<1x32x32xbf16> to vector<32x32xbf16>
    %cst_50 = arith.constant dense<0.000000e+00> : vector<8x32xf32>
    %119 = tpu.matmul %116, %118, %cst_50 {dimension_numbers = #tpu.dot_dimension_numbers<[1], [0], [0], [1], [0, 0, 1, 1], [], []>} : vector<8x32xbf16>, vector<32x32xbf16>, vector<8x32xf32> -> vector<8x32xf32>
    %c0_51 = arith.constant 0 : index
    %c0_52 = arith.constant 0 : index
    %120 = vector.load %arg8[%c0_51, %c0_52] : memref<2x32xf32, #tpu.memory_space<vmem>>, vector<1x32xf32>
    %121 = vector.shape_cast %120 : vector<1x32xf32> to vector<32xf32>
    %122 = vector.shape_cast %121 : vector<32xf32> to vector<1x32xf32>
    %123 = vector.broadcast %122 : vector<1x32xf32> to vector<8x32xf32>
    %124 = arith.addf %119, %123 : vector<8x32xf32>
    %125 = arith.addf %26, %124 : vector<8x32xf32>
    %c0_53 = arith.constant 0 : index
    %c0_54 = arith.constant 0 : index
    %126 = vector.load %arg13[%c0_53, %c0_54] : memref<2x32xf32, #tpu.memory_space<vmem>>, vector<1x32xf32>
    %127 = vector.shape_cast %126 : vector<1x32xf32> to vector<32xf32>
    %c0_55 = arith.constant 0 : index
    %c0_56 = arith.constant 0 : index
    %128 = vector.load %arg14[%c0_55, %c0_56] : memref<2x32xf32, #tpu.memory_space<vmem>>, vector<1x32xf32>
    %129 = vector.shape_cast %128 : vector<1x32xf32> to vector<32xf32>
    %cst_57 = arith.constant dense<0.000000e+00> : vector<8xf32>
    %130 = vector.multi_reduction <add>, %125, %cst_57 [1] : vector<8x32xf32> to vector<8xf32>
    %131 = vector.shape_cast %130 : vector<8xf32> to vector<8x1xf32>
    %cst_58 = arith.constant 3.200000e+01 : f32
    %132 = vector.broadcast %cst_58 : f32 to vector<8x1xf32>
    %133 = arith.divf %131, %132 : vector<8x1xf32>
    %134 = vector.broadcast %133 : vector<8x1xf32> to vector<8x32xf32>
    %135 = arith.subf %125, %134 : vector<8x32xf32>
    %136 = arith.mulf %135, %135 : vector<8x32xf32>
    %cst_59 = arith.constant dense<0.000000e+00> : vector<8xf32>
    %137 = vector.multi_reduction <add>, %136, %cst_59 [1] : vector<8x32xf32> to vector<8xf32>
    %138 = vector.shape_cast %137 : vector<8xf32> to vector<8x1xf32>
    %cst_60 = arith.constant 3.200000e+01 : f32
    %139 = vector.broadcast %cst_60 : f32 to vector<8x1xf32>
    %140 = arith.divf %138, %139 : vector<8x1xf32>
    %cst_61 = arith.constant 9.99999996E-13 : f32
    %141 = vector.broadcast %cst_61 : f32 to vector<8x1xf32>
    %142 = arith.addf %140, %141 : vector<8x1xf32>
    %143 = math.rsqrt %142 : vector<8x1xf32>
    %144 = vector.broadcast %143 : vector<8x1xf32> to vector<8x32xf32>
    %145 = arith.mulf %135, %144 : vector<8x32xf32>
    %146 = vector.shape_cast %127 : vector<32xf32> to vector<1x32xf32>
    %147 = vector.broadcast %146 : vector<1x32xf32> to vector<8x32xf32>
    %148 = arith.mulf %145, %147 : vector<8x32xf32>
    %149 = vector.shape_cast %129 : vector<32xf32> to vector<1x32xf32>
    %150 = vector.broadcast %149 : vector<1x32xf32> to vector<8x32xf32>
    %151 = arith.addf %148, %150 : vector<8x32xf32>
    %152 = arith.truncf %151 : vector<8x32xf32> to vector<8x32xbf16>
    %c0_62 = arith.constant 0 : index
    %c0_63 = arith.constant 0 : index
    %c0_64 = arith.constant 0 : index
    %153 = vector.load %arg9[%c0_62, %c0_63, %c0_64] : memref<2x32x64xbf16, #tpu.memory_space<vmem>>, vector<1x32x64xbf16>
    %154 = vector.shape_cast %153 : vector<1x32x64xbf16> to vector<32x64xbf16>
    %cst_65 = arith.constant dense<0.000000e+00> : vector<8x64xf32>
    %155 = tpu.matmul %152, %154, %cst_65 {dimension_numbers = #tpu.dot_dimension_numbers<[1], [0], [0], [1], [0, 0, 1, 1], [], []>} : vector<8x32xbf16>, vector<32x64xbf16>, vector<8x64xf32> -> vector<8x64xf32>
    %c0_66 = arith.constant 0 : index
    %c0_67 = arith.constant 0 : index
    %156 = vector.load %arg10[%c0_66, %c0_67] : memref<2x64xf32, #tpu.memory_space<vmem>>, vector<1x64xf32>
    %157 = vector.shape_cast %156 : vector<1x64xf32> to vector<64xf32>
    %158 = vector.shape_cast %157 : vector<64xf32> to vector<1x64xf32>
    %159 = vector.broadcast %158 : vector<1x64xf32> to vector<8x64xf32>
    %160 = arith.addf %155, %159 : vector<8x64xf32>
    %161 = arith.mulf %160, %160 : vector<8x64xf32>
    %162 = arith.mulf %160, %161 : vector<8x64xf32>
    %cst_68 = arith.constant 4.471500e-02 : f32
    %163 = vector.broadcast %cst_68 : f32 to vector<8x64xf32>
    %164 = arith.mulf %163, %162 : vector<8x64xf32>
    %165 = arith.addf %160, %164 : vector<8x64xf32>
    %cst_69 = arith.constant 0.797884583 : f32
    %166 = vector.broadcast %cst_69 : f32 to vector<8x64xf32>
    %167 = arith.mulf %166, %165 : vector<8x64xf32>
    %168 = math.tanh %167 : vector<8x64xf32>
    %cst_70 = arith.constant 1.000000e+00 : f32
    %169 = vector.broadcast %cst_70 : f32 to vector<8x64xf32>
    %170 = arith.addf %169, %168 : vector<8x64xf32>
    %cst_71 = arith.constant 5.000000e-01 : f32
    %171 = vector.broadcast %cst_71 : f32 to vector<8x64xf32>
    %172 = arith.mulf %171, %170 : vector<8x64xf32>
    %173 = arith.mulf %160, %172 : vector<8x64xf32>
    %174 = arith.truncf %173 : vector<8x64xf32> to vector<8x64xbf16>
    %c0_72 = arith.constant 0 : index
    %c0_73 = arith.constant 0 : index
    %c0_74 = arith.constant 0 : index
    %175 = vector.load %arg11[%c0_72, %c0_73, %c0_74] : memref<2x64x32xbf16, #tpu.memory_space<vmem>>, vector<1x64x32xbf16>
    %176 = vector.shape_cast %175 : vector<1x64x32xbf16> to vector<64x32xbf16>
    %cst_75 = arith.constant dense<0.000000e+00> : vector<8x32xf32>
    %177 = tpu.matmul %174, %176, %cst_75 {dimension_numbers = #tpu.dot_dimension_numbers<[1], [0], [0], [1], [0, 0, 1, 1], [], []>} : vector<8x64xbf16>, vector<64x32xbf16>, vector<8x32xf32> -> vector<8x32xf32>
    %c0_76 = arith.constant 0 : index
    %c0_77 = arith.constant 0 : index
    %178 = vector.load %arg12[%c0_76, %c0_77] : memref<2x32xf32, #tpu.memory_space<vmem>>, vector<1x32xf32>
    %179 = vector.shape_cast %178 : vector<1x32xf32> to vector<32xf32>
    %180 = vector.shape_cast %179 : vector<32xf32> to vector<1x32xf32>
    %181 = vector.broadcast %180 : vector<1x32xf32> to vector<8x32xf32>
    %182 = arith.addf %177, %181 : vector<8x32xf32>
    %183 = arith.addf %151, %182 : vector<8x32xf32>
    %c0_78 = arith.constant 0 : index
    %c0_79 = arith.constant 0 : index
    %184 = vector.load %arg15[%c0_78, %c0_79] : memref<2x32xf32, #tpu.memory_space<vmem>>, vector<1x32xf32>
    %185 = vector.shape_cast %184 : vector<1x32xf32> to vector<32xf32>
    %c0_80 = arith.constant 0 : index
    %c0_81 = arith.constant 0 : index
    %186 = vector.load %arg16[%c0_80, %c0_81] : memref<2x32xf32, #tpu.memory_space<vmem>>, vector<1x32xf32>
    %187 = vector.shape_cast %186 : vector<1x32xf32> to vector<32xf32>
    %cst_82 = arith.constant dense<0.000000e+00> : vector<8xf32>
    %188 = vector.multi_reduction <add>, %183, %cst_82 [1] : vector<8x32xf32> to vector<8xf32>
    %189 = vector.shape_cast %188 : vector<8xf32> to vector<8x1xf32>
    %cst_83 = arith.constant 3.200000e+01 : f32
    %190 = vector.broadcast %cst_83 : f32 to vector<8x1xf32>
    %191 = arith.divf %189, %190 : vector<8x1xf32>
    %192 = vector.broadcast %191 : vector<8x1xf32> to vector<8x32xf32>
    %193 = arith.subf %183, %192 : vector<8x32xf32>
    %194 = arith.mulf %193, %193 : vector<8x32xf32>
    %cst_84 = arith.constant dense<0.000000e+00> : vector<8xf32>
    %195 = vector.multi_reduction <add>, %194, %cst_84 [1] : vector<8x32xf32> to vector<8xf32>
    %196 = vector.shape_cast %195 : vector<8xf32> to vector<8x1xf32>
    %cst_85 = arith.constant 3.200000e+01 : f32
    %197 = vector.broadcast %cst_85 : f32 to vector<8x1xf32>
    %198 = arith.divf %196, %197 : vector<8x1xf32>
    %cst_86 = arith.constant 9.99999996E-13 : f32
    %199 = vector.broadcast %cst_86 : f32 to vector<8x1xf32>
    %200 = arith.addf %198, %199 : vector<8x1xf32>
    %201 = math.rsqrt %200 : vector<8x1xf32>
    %202 = vector.broadcast %201 : vector<8x1xf32> to vector<8x32xf32>
    %203 = arith.mulf %193, %202 : vector<8x32xf32>
    %204 = vector.shape_cast %185 : vector<32xf32> to vector<1x32xf32>
    %205 = vector.broadcast %204 : vector<1x32xf32> to vector<8x32xf32>
    %206 = arith.mulf %203, %205 : vector<8x32xf32>
    %207 = vector.shape_cast %187 : vector<32xf32> to vector<1x32xf32>
    %208 = vector.broadcast %207 : vector<1x32xf32> to vector<8x32xf32>
    %209 = arith.addf %206, %208 : vector<8x32xf32>
    %210 = arith.truncf %209 : vector<8x32xf32> to vector<8x32xbf16>
    %c1_87 = arith.constant 1 : index
    %c0_88 = arith.constant 0 : index
    %c0_89 = arith.constant 0 : index
    %c0_90 = arith.constant 0 : index
    %211 = vector.load %arg5[%c1_87, %c0_88, %c0_89, %c0_90] : memref<2x3x32x32xbf16, #tpu.memory_space<vmem>>, vector<1x1x32x32xbf16>
    %212 = vector.shape_cast %211 : vector<1x1x32x32xbf16> to vector<32x32xbf16>
    %cst_91 = arith.constant dense<0.000000e+00> : vector<8x32xf32>
    %213 = tpu.matmul %210, %212, %cst_91 {dimension_numbers = #tpu.dot_dimension_numbers<[1], [0], [0], [1], [0, 0, 1, 1], [], []>} : vector<8x32xbf16>, vector<32x32xbf16>, vector<8x32xf32> -> vector<8x32xf32>
    %c1_92 = arith.constant 1 : index
    %c0_93 = arith.constant 0 : index
    %c0_94 = arith.constant 0 : index
    %214 = vector.load %arg6[%c1_92, %c0_93, %c0_94] : memref<2x3x32xf32, #tpu.memory_space<vmem>>, vector<1x1x32xf32>
    %215 = vector.shape_cast %214 : vector<1x1x32xf32> to vector<32xf32>
    %216 = vector.shape_cast %215 : vector<32xf32> to vector<1x32xf32>
    %217 = vector.broadcast %216 : vector<1x32xf32> to vector<8x32xf32>
    %218 = arith.addf %213, %217 : vector<8x32xf32>
    %c1_95 = arith.constant 1 : index
    %c1_96 = arith.constant 1 : index
    %c0_97 = arith.constant 0 : index
    %c0_98 = arith.constant 0 : index
    %219 = vector.load %arg5[%c1_95, %c1_96, %c0_97, %c0_98] : memref<2x3x32x32xbf16, #tpu.memory_space<vmem>>, vector<1x1x32x32xbf16>
    %220 = vector.shape_cast %219 : vector<1x1x32x32xbf16> to vector<32x32xbf16>
    %cst_99 = arith.constant dense<0.000000e+00> : vector<8x32xf32>
    %221 = tpu.matmul %210, %220, %cst_99 {dimension_numbers = #tpu.dot_dimension_numbers<[1], [0], [0], [1], [0, 0, 1, 1], [], []>} : vector<8x32xbf16>, vector<32x32xbf16>, vector<8x32xf32> -> vector<8x32xf32>
    %c1_100 = arith.constant 1 : index
    %c1_101 = arith.constant 1 : index
    %c0_102 = arith.constant 0 : index
    %222 = vector.load %arg6[%c1_100, %c1_101, %c0_102] : memref<2x3x32xf32, #tpu.memory_space<vmem>>, vector<1x1x32xf32>
    %223 = vector.shape_cast %222 : vector<1x1x32xf32> to vector<32xf32>
    %224 = vector.shape_cast %223 : vector<32xf32> to vector<1x32xf32>
    %225 = vector.broadcast %224 : vector<1x32xf32> to vector<8x32xf32>
    %226 = arith.addf %221, %225 : vector<8x32xf32>
    %c1_103 = arith.constant 1 : index
    %c2_104 = arith.constant 2 : index
    %c0_105 = arith.constant 0 : index
    %c0_106 = arith.constant 0 : index
    %227 = vector.load %arg5[%c1_103, %c2_104, %c0_105, %c0_106] : memref<2x3x32x32xbf16, #tpu.memory_space<vmem>>, vector<1x1x32x32xbf16>
    %228 = vector.shape_cast %227 : vector<1x1x32x32xbf16> to vector<32x32xbf16>
    %cst_107 = arith.constant dense<0.000000e+00> : vector<8x32xf32>
    %229 = tpu.matmul %210, %228, %cst_107 {dimension_numbers = #tpu.dot_dimension_numbers<[1], [0], [0], [1], [0, 0, 1, 1], [], []>} : vector<8x32xbf16>, vector<32x32xbf16>, vector<8x32xf32> -> vector<8x32xf32>
    %c1_108 = arith.constant 1 : index
    %c2_109 = arith.constant 2 : index
    %c0_110 = arith.constant 0 : index
    %230 = vector.load %arg6[%c1_108, %c2_109, %c0_110] : memref<2x3x32xf32, #tpu.memory_space<vmem>>, vector<1x1x32xf32>
    %231 = vector.shape_cast %230 : vector<1x1x32xf32> to vector<32xf32>
    %232 = vector.shape_cast %231 : vector<32xf32> to vector<1x32xf32>
    %233 = vector.broadcast %232 : vector<1x32xf32> to vector<8x32xf32>
    %234 = arith.addf %229, %233 : vector<8x32xf32>
    %235 = arith.truncf %226 : vector<8x32xf32> to vector<8x32xbf16>
    %cst_111 = arith.constant 0.000000e+00 : f32
    %236 = vector.broadcast %cst_111 : f32 to vector<8x32xf32>
    %c0_i32_112 = arith.constant 0 : i32
    %237 = vector.broadcast %c0_i32_112 : i32 to vector<1x32xi32>
    %238 = arith.cmpi sge, %4, %237 : vector<1x32xi32>
    %c16_i32_113 = arith.constant 16 : i32
    %239 = vector.broadcast %c16_i32_113 : i32 to vector<1x32xi32>
    %240 = arith.cmpi slt, %4, %239 : vector<1x32xi32>
    %241 = arith.andi %238, %240 : vector<1x32xi1>
    %242 = arith.extui %241 : vector<1x32xi1> to vector<1x32xi32>
    %243 = arith.sitofp %242 : vector<1x32xi32> to vector<1x32xf32>
    %244 = vector.broadcast %243 : vector<1x32xf32> to vector<8x32xf32>
    %245 = arith.mulf %218, %244 : vector<8x32xf32>
    %246 = arith.truncf %245 : vector<8x32xf32> to vector<8x32xbf16>
    %cst_114 = arith.constant dense<0.000000e+00> : vector<8x8xf32>
    %247 = tpu.matmul %246, %235, %cst_114 {dimension_numbers = #tpu.dot_dimension_numbers<[1], [1], [0], [0], [0, 0, 1, 0], [], []>} : vector<8x32xbf16>, vector<8x32xbf16>, vector<8x8xf32> -> vector<8x8xf32>
    %cst_115 = arith.constant 2.500000e-01 : f32
    %248 = vector.broadcast %cst_115 : f32 to vector<8x8xf32>
    %249 = arith.mulf %247, %248 : vector<8x8xf32>
    %250 = vector.broadcast %3 : vector<1x8xf32> to vector<8x8xf32>
    %251 = arith.addf %249, %250 : vector<8x8xf32>
    %cst_116 = arith.constant dense<0xFF800000> : vector<8xf32>
    %252 = vector.multi_reduction <maximumf>, %251, %cst_116 [1] : vector<8x8xf32> to vector<8xf32>
    %253 = vector.shape_cast %252 : vector<8xf32> to vector<8x1xf32>
    %254 = vector.broadcast %253 : vector<8x1xf32> to vector<8x8xf32>
    %255 = arith.subf %251, %254 : vector<8x8xf32>
    %256 = math.exp %255 : vector<8x8xf32>
    %cst_117 = arith.constant dense<0.000000e+00> : vector<8xf32>
    %257 = vector.multi_reduction <add>, %256, %cst_117 [1] : vector<8x8xf32> to vector<8xf32>
    %258 = vector.shape_cast %257 : vector<8xf32> to vector<8x1xf32>
    %259 = tpu.reciprocal %258 {approx = true} : vector<8x1xf32> -> vector<8x1xf32>
    %260 = vector.broadcast %259 : vector<8x1xf32> to vector<8x8xf32>
    %261 = arith.mulf %256, %260 : vector<8x8xf32>
    %262 = vector.broadcast %243 : vector<1x32xf32> to vector<8x32xf32>
    %263 = arith.mulf %234, %262 : vector<8x32xf32>
    %264 = arith.truncf %263 : vector<8x32xf32> to vector<8x32xbf16>
    %265 = arith.truncf %261 : vector<8x8xf32> to vector<8x8xbf16>
    %cst_118 = arith.constant dense<0.000000e+00> : vector<8x32xf32>
    %266 = tpu.matmul %265, %264, %cst_118 {dimension_numbers = #tpu.dot_dimension_numbers<[1], [0], [0], [1], [0, 0, 1, 1], [], []>} : vector<8x8xbf16>, vector<8x32xbf16>, vector<8x32xf32> -> vector<8x32xf32>
    %267 = arith.addf %236, %266 : vector<8x32xf32>
    %c16_i32_119 = arith.constant 16 : i32
    %268 = vector.broadcast %c16_i32_119 : i32 to vector<1x32xi32>
    %269 = arith.cmpi sge, %4, %268 : vector<1x32xi32>
    %c32_i32_120 = arith.constant 32 : i32
    %270 = vector.broadcast %c32_i32_120 : i32 to vector<1x32xi32>
    %271 = arith.cmpi slt, %4, %270 : vector<1x32xi32>
    %272 = arith.andi %269, %271 : vector<1x32xi1>
    %273 = arith.extui %272 : vector<1x32xi1> to vector<1x32xi32>
    %274 = arith.sitofp %273 : vector<1x32xi32> to vector<1x32xf32>
    %275 = vector.broadcast %274 : vector<1x32xf32> to vector<8x32xf32>
    %276 = arith.mulf %218, %275 : vector<8x32xf32>
    %277 = arith.truncf %276 : vector<8x32xf32> to vector<8x32xbf16>
    %cst_121 = arith.constant dense<0.000000e+00> : vector<8x8xf32>
    %278 = tpu.matmul %277, %235, %cst_121 {dimension_numbers = #tpu.dot_dimension_numbers<[1], [1], [0], [0], [0, 0, 1, 0], [], []>} : vector<8x32xbf16>, vector<8x32xbf16>, vector<8x8xf32> -> vector<8x8xf32>
    %cst_122 = arith.constant 2.500000e-01 : f32
    %279 = vector.broadcast %cst_122 : f32 to vector<8x8xf32>
    %280 = arith.mulf %278, %279 : vector<8x8xf32>
    %281 = vector.broadcast %3 : vector<1x8xf32> to vector<8x8xf32>
    %282 = arith.addf %280, %281 : vector<8x8xf32>
    %cst_123 = arith.constant dense<0xFF800000> : vector<8xf32>
    %283 = vector.multi_reduction <maximumf>, %282, %cst_123 [1] : vector<8x8xf32> to vector<8xf32>
    %284 = vector.shape_cast %283 : vector<8xf32> to vector<8x1xf32>
    %285 = vector.broadcast %284 : vector<8x1xf32> to vector<8x8xf32>
    %286 = arith.subf %282, %285 : vector<8x8xf32>
    %287 = math.exp %286 : vector<8x8xf32>
    %cst_124 = arith.constant dense<0.000000e+00> : vector<8xf32>
    %288 = vector.multi_reduction <add>, %287, %cst_124 [1] : vector<8x8xf32> to vector<8xf32>
    %289 = vector.shape_cast %288 : vector<8xf32> to vector<8x1xf32>
    %290 = tpu.reciprocal %289 {approx = true} : vector<8x1xf32> -> vector<8x1xf32>
    %291 = vector.broadcast %290 : vector<8x1xf32> to vector<8x8xf32>
    %292 = arith.mulf %287, %291 : vector<8x8xf32>
    %293 = vector.broadcast %274 : vector<1x32xf32> to vector<8x32xf32>
    %294 = arith.mulf %234, %293 : vector<8x32xf32>
    %295 = arith.truncf %294 : vector<8x32xf32> to vector<8x32xbf16>
    %296 = arith.truncf %292 : vector<8x8xf32> to vector<8x8xbf16>
    %cst_125 = arith.constant dense<0.000000e+00> : vector<8x32xf32>
    %297 = tpu.matmul %296, %295, %cst_125 {dimension_numbers = #tpu.dot_dimension_numbers<[1], [0], [0], [1], [0, 0, 1, 1], [], []>} : vector<8x8xbf16>, vector<8x32xbf16>, vector<8x32xf32> -> vector<8x32xf32>
    %298 = arith.addf %267, %297 : vector<8x32xf32>
    %299 = arith.truncf %298 : vector<8x32xf32> to vector<8x32xbf16>
    %c1_126 = arith.constant 1 : index
    %c0_127 = arith.constant 0 : index
    %c0_128 = arith.constant 0 : index
    %300 = vector.load %arg7[%c1_126, %c0_127, %c0_128] : memref<2x32x32xbf16, #tpu.memory_space<vmem>>, vector<1x32x32xbf16>
    %301 = vector.shape_cast %300 : vector<1x32x32xbf16> to vector<32x32xbf16>
    %cst_129 = arith.constant dense<0.000000e+00> : vector<8x32xf32>
    %302 = tpu.matmul %299, %301, %cst_129 {dimension_numbers = #tpu.dot_dimension_numbers<[1], [0], [0], [1], [0, 0, 1, 1], [], []>} : vector<8x32xbf16>, vector<32x32xbf16>, vector<8x32xf32> -> vector<8x32xf32>
    %c1_130 = arith.constant 1 : index
    %c0_131 = arith.constant 0 : index
    %303 = vector.load %arg8[%c1_130, %c0_131] : memref<2x32xf32, #tpu.memory_space<vmem>>, vector<1x32xf32>
    %304 = vector.shape_cast %303 : vector<1x32xf32> to vector<32xf32>
    %305 = vector.shape_cast %304 : vector<32xf32> to vector<1x32xf32>
    %306 = vector.broadcast %305 : vector<1x32xf32> to vector<8x32xf32>
    %307 = arith.addf %302, %306 : vector<8x32xf32>
    %308 = arith.addf %209, %307 : vector<8x32xf32>
    %c1_132 = arith.constant 1 : index
    %c0_133 = arith.constant 0 : index
    %309 = vector.load %arg13[%c1_132, %c0_133] : memref<2x32xf32, #tpu.memory_space<vmem>>, vector<1x32xf32>
    %310 = vector.shape_cast %309 : vector<1x32xf32> to vector<32xf32>
    %c1_134 = arith.constant 1 : index
    %c0_135 = arith.constant 0 : index
    %311 = vector.load %arg14[%c1_134, %c0_135] : memref<2x32xf32, #tpu.memory_space<vmem>>, vector<1x32xf32>
    %312 = vector.shape_cast %311 : vector<1x32xf32> to vector<32xf32>
    %cst_136 = arith.constant dense<0.000000e+00> : vector<8xf32>
    %313 = vector.multi_reduction <add>, %308, %cst_136 [1] : vector<8x32xf32> to vector<8xf32>
    %314 = vector.shape_cast %313 : vector<8xf32> to vector<8x1xf32>
    %cst_137 = arith.constant 3.200000e+01 : f32
    %315 = vector.broadcast %cst_137 : f32 to vector<8x1xf32>
    %316 = arith.divf %314, %315 : vector<8x1xf32>
    %317 = vector.broadcast %316 : vector<8x1xf32> to vector<8x32xf32>
    %318 = arith.subf %308, %317 : vector<8x32xf32>
    %319 = arith.mulf %318, %318 : vector<8x32xf32>
    %cst_138 = arith.constant dense<0.000000e+00> : vector<8xf32>
    %320 = vector.multi_reduction <add>, %319, %cst_138 [1] : vector<8x32xf32> to vector<8xf32>
    %321 = vector.shape_cast %320 : vector<8xf32> to vector<8x1xf32>
    %cst_139 = arith.constant 3.200000e+01 : f32
    %322 = vector.broadcast %cst_139 : f32 to vector<8x1xf32>
    %323 = arith.divf %321, %322 : vector<8x1xf32>
    %cst_140 = arith.constant 9.99999996E-13 : f32
    %324 = vector.broadcast %cst_140 : f32 to vector<8x1xf32>
    %325 = arith.addf %323, %324 : vector<8x1xf32>
    %326 = math.rsqrt %325 : vector<8x1xf32>
    %327 = vector.broadcast %326 : vector<8x1xf32> to vector<8x32xf32>
    %328 = arith.mulf %318, %327 : vector<8x32xf32>
    %329 = vector.shape_cast %310 : vector<32xf32> to vector<1x32xf32>
    %330 = vector.broadcast %329 : vector<1x32xf32> to vector<8x32xf32>
    %331 = arith.mulf %328, %330 : vector<8x32xf32>
    %332 = vector.shape_cast %312 : vector<32xf32> to vector<1x32xf32>
    %333 = vector.broadcast %332 : vector<1x32xf32> to vector<8x32xf32>
    %334 = arith.addf %331, %333 : vector<8x32xf32>
    %335 = arith.truncf %334 : vector<8x32xf32> to vector<8x32xbf16>
    %c1_141 = arith.constant 1 : index
    %c0_142 = arith.constant 0 : index
    %c0_143 = arith.constant 0 : index
    %336 = vector.load %arg9[%c1_141, %c0_142, %c0_143] : memref<2x32x64xbf16, #tpu.memory_space<vmem>>, vector<1x32x64xbf16>
    %337 = vector.shape_cast %336 : vector<1x32x64xbf16> to vector<32x64xbf16>
    %cst_144 = arith.constant dense<0.000000e+00> : vector<8x64xf32>
    %338 = tpu.matmul %335, %337, %cst_144 {dimension_numbers = #tpu.dot_dimension_numbers<[1], [0], [0], [1], [0, 0, 1, 1], [], []>} : vector<8x32xbf16>, vector<32x64xbf16>, vector<8x64xf32> -> vector<8x64xf32>
    %c1_145 = arith.constant 1 : index
    %c0_146 = arith.constant 0 : index
    %339 = vector.load %arg10[%c1_145, %c0_146] : memref<2x64xf32, #tpu.memory_space<vmem>>, vector<1x64xf32>
    %340 = vector.shape_cast %339 : vector<1x64xf32> to vector<64xf32>
    %341 = vector.shape_cast %340 : vector<64xf32> to vector<1x64xf32>
    %342 = vector.broadcast %341 : vector<1x64xf32> to vector<8x64xf32>
    %343 = arith.addf %338, %342 : vector<8x64xf32>
    %344 = arith.mulf %343, %343 : vector<8x64xf32>
    %345 = arith.mulf %343, %344 : vector<8x64xf32>
    %cst_147 = arith.constant 4.471500e-02 : f32
    %346 = vector.broadcast %cst_147 : f32 to vector<8x64xf32>
    %347 = arith.mulf %346, %345 : vector<8x64xf32>
    %348 = arith.addf %343, %347 : vector<8x64xf32>
    %cst_148 = arith.constant 0.797884583 : f32
    %349 = vector.broadcast %cst_148 : f32 to vector<8x64xf32>
    %350 = arith.mulf %349, %348 : vector<8x64xf32>
    %351 = math.tanh %350 : vector<8x64xf32>
    %cst_149 = arith.constant 1.000000e+00 : f32
    %352 = vector.broadcast %cst_149 : f32 to vector<8x64xf32>
    %353 = arith.addf %352, %351 : vector<8x64xf32>
    %cst_150 = arith.constant 5.000000e-01 : f32
    %354 = vector.broadcast %cst_150 : f32 to vector<8x64xf32>
    %355 = arith.mulf %354, %353 : vector<8x64xf32>
    %356 = arith.mulf %343, %355 : vector<8x64xf32>
    %357 = arith.truncf %356 : vector<8x64xf32> to vector<8x64xbf16>
    %c1_151 = arith.constant 1 : index
    %c0_152 = arith.constant 0 : index
    %c0_153 = arith.constant 0 : index
    %358 = vector.load %arg11[%c1_151, %c0_152, %c0_153] : memref<2x64x32xbf16, #tpu.memory_space<vmem>>, vector<1x64x32xbf16>
    %359 = vector.shape_cast %358 : vector<1x64x32xbf16> to vector<64x32xbf16>
    %cst_154 = arith.constant dense<0.000000e+00> : vector<8x32xf32>
    %360 = tpu.matmul %357, %359, %cst_154 {dimension_numbers = #tpu.dot_dimension_numbers<[1], [0], [0], [1], [0, 0, 1, 1], [], []>} : vector<8x64xbf16>, vector<64x32xbf16>, vector<8x32xf32> -> vector<8x32xf32>
    %c1_155 = arith.constant 1 : index
    %c0_156 = arith.constant 0 : index
    %361 = vector.load %arg12[%c1_155, %c0_156] : memref<2x32xf32, #tpu.memory_space<vmem>>, vector<1x32xf32>
    %362 = vector.shape_cast %361 : vector<1x32xf32> to vector<32xf32>
    %363 = vector.shape_cast %362 : vector<32xf32> to vector<1x32xf32>
    %364 = vector.broadcast %363 : vector<1x32xf32> to vector<8x32xf32>
    %365 = arith.addf %360, %364 : vector<8x32xf32>
    %366 = arith.addf %334, %365 : vector<8x32xf32>
    %c1_157 = arith.constant 1 : index
    %c0_158 = arith.constant 0 : index
    %367 = vector.load %arg15[%c1_157, %c0_158] : memref<2x32xf32, #tpu.memory_space<vmem>>, vector<1x32xf32>
    %368 = vector.shape_cast %367 : vector<1x32xf32> to vector<32xf32>
    %c1_159 = arith.constant 1 : index
    %c0_160 = arith.constant 0 : index
    %369 = vector.load %arg16[%c1_159, %c0_160] : memref<2x32xf32, #tpu.memory_space<vmem>>, vector<1x32xf32>
    %370 = vector.shape_cast %369 : vector<1x32xf32> to vector<32xf32>
    %cst_161 = arith.constant dense<0.000000e+00> : vector<8xf32>
    %371 = vector.multi_reduction <add>, %366, %cst_161 [1] : vector<8x32xf32> to vector<8xf32>
    %372 = vector.shape_cast %371 : vector<8xf32> to vector<8x1xf32>
    %cst_162 = arith.constant 3.200000e+01 : f32
    %373 = vector.broadcast %cst_162 : f32 to vector<8x1xf32>
    %374 = arith.divf %372, %373 : vector<8x1xf32>
    %375 = vector.broadcast %374 : vector<8x1xf32> to vector<8x32xf32>
    %376 = arith.subf %366, %375 : vector<8x32xf32>
    %377 = arith.mulf %376, %376 : vector<8x32xf32>
    %cst_163 = arith.constant dense<0.000000e+00> : vector<8xf32>
    %378 = vector.multi_reduction <add>, %377, %cst_163 [1] : vector<8x32xf32> to vector<8xf32>
    %379 = vector.shape_cast %378 : vector<8xf32> to vector<8x1xf32>
    %cst_164 = arith.constant 3.200000e+01 : f32
    %380 = vector.broadcast %cst_164 : f32 to vector<8x1xf32>
    %381 = arith.divf %379, %380 : vector<8x1xf32>
    %cst_165 = arith.constant 9.99999996E-13 : f32
    %382 = vector.broadcast %cst_165 : f32 to vector<8x1xf32>
    %383 = arith.addf %381, %382 : vector<8x1xf32>
    %384 = math.rsqrt %383 : vector<8x1xf32>
    %385 = vector.broadcast %384 : vector<8x1xf32> to vector<8x32xf32>
    %386 = arith.mulf %376, %385 : vector<8x32xf32>
    %387 = vector.shape_cast %368 : vector<32xf32> to vector<1x32xf32>
    %388 = vector.broadcast %387 : vector<1x32xf32> to vector<8x32xf32>
    %389 = arith.mulf %386, %388 : vector<8x32xf32>
    %390 = vector.shape_cast %370 : vector<32xf32> to vector<1x32xf32>
    %391 = vector.broadcast %390 : vector<1x32xf32> to vector<8x32xf32>
    %392 = arith.addf %389, %391 : vector<8x32xf32>
    %c0_166 = arith.constant 0 : index
    %c0_167 = arith.constant 0 : index
    %c0_168 = arith.constant 0 : index
    %393 = vector.load %arg17[%c0_166, %c0_167, %c0_168] : memref<1x8x32xf32, #tpu.memory_space<vmem>>, vector<1x8x32xf32>
    %394 = vector.shape_cast %393 : vector<1x8x32xf32> to vector<8x32xf32>
    %395 = vector.shape_cast %392 : vector<8x32xf32> to vector<1x8x32xf32>
    tpu.vector_store %arg17[%c0_166, %c0_167, %c0_168], %395 {strides = array<i32>} : memref<1x8x32xf32, #tpu.memory_space<vmem>>, vector<1x8x32xf32>,
    return
  }
  func.func @transform_0(%arg0: i32) -> (i32, i32, i32) {
    %c0_i32 = arith.constant 0 : i32
    %c0_i32_0 = arith.constant 0 : i32
    %c0_i32_1 = arith.constant 0 : i32
    return %arg0, %c0_i32, %c0_i32_0 : i32, i32, i32
  }
  func.func @transform_1(%arg0: i32) -> (i32, i32, i32) {
    %c0_i32 = arith.constant 0 : i32
    %c0_i32_0 = arith.constant 0 : i32
    %c0_i32_1 = arith.constant 0 : i32
    return %arg0, %c0_i32, %c0_i32_0 : i32, i32, i32
  }
  func.func @transform_2(%arg0: i32) -> (i32, i32) {
    %c0_i32 = arith.constant 0 : i32
    %c0_i32_0 = arith.constant 0 : i32
    %c0_i32_1 = arith.constant 0 : i32
    return %c0_i32, %c0_i32_0 : i32, i32
  }
  func.func @transform_3(%arg0: i32) -> (i32, i32) {
    %c0_i32 = arith.constant 0 : i32
    %c0_i32_0 = arith.constant 0 : i32
    %c0_i32_1 = arith.constant 0 : i32
    return %c0_i32, %c0_i32_0 : i32, i32
  }
  func.func @transform_4(%arg0: i32) -> (i32, i32, i32, i32) {
    %c0_i32 = arith.constant 0 : i32
    %c0_i32_0 = arith.constant 0 : i32
    %c0_i32_1 = arith.constant 0 : i32
    %c0_i32_2 = arith.constant 0 : i32
    %c0_i32_3 = arith.constant 0 : i32
    return %c0_i32, %c0_i32_0, %c0_i32_1, %c0_i32_2 : i32, i32, i32, i32
  }
  func.func @transform_5(%arg0: i32) -> (i32, i32, i32) {
    %c0_i32 = arith.constant 0 : i32
    %c0_i32_0 = arith.constant 0 : i32
    %c0_i32_1 = arith.constant 0 : i32
    %c0_i32_2 = arith.constant 0 : i32
    return %c0_i32, %c0_i32_0, %c0_i32_1 : i32, i32, i32
  }
  func.func @transform_6(%arg0: i32) -> (i32, i32, i32) {
    %c0_i32 = arith.constant 0 : i32
    %c0_i32_0 = arith.constant 0 : i32
    %c0_i32_1 = arith.constant 0 : i32
    %c0_i32_2 = arith.constant 0 : i32
    return %c0_i32, %c0_i32_0, %c0_i32_1 : i32, i32, i32
  }
  func.func @transform_7(%arg0: i32) -> (i32, i32) {
    %c0_i32 = arith.constant 0 : i32
    %c0_i32_0 = arith.constant 0 : i32
    %c0_i32_1 = arith.constant 0 : i32
    return %c0_i32, %c0_i32_0 : i32, i32
  }
  func.func @transform_8(%arg0: i32) -> (i32, i32, i32) {
    %c0_i32 = arith.constant 0 : i32
    %c0_i32_0 = arith.constant 0 : i32
    %c0_i32_1 = arith.constant 0 : i32
    %c0_i32_2 = arith.constant 0 : i32
    return %c0_i32, %c0_i32_0, %c0_i32_1 : i32, i32, i32
  }
  func.func @transform_9(%arg0: i32) -> (i32, i32) {
    %c0_i32 = arith.constant 0 : i32
    %c0_i32_0 = arith.constant 0 : i32
    %c0_i32_1 = arith.constant 0 : i32
    return %c0_i32, %c0_i32_0 : i32, i32
  }
  func.func @transform_10(%arg0: i32) -> (i32, i32, i32) {
    %c0_i32 = arith.constant 0 : i32
    %c0_i32_0 = arith.constant 0 : i32
    %c0_i32_1 = arith.constant 0 : i32
    %c0_i32_2 = arith.constant 0 : i32
    return %c0_i32, %c0_i32_0, %c0_i32_1 : i32, i32, i32
  }
  func.func @transform_11(%arg0: i32) -> (i32, i32) {
    %c0_i32 = arith.constant 0 : i32
    %c0_i32_0 = arith.constant 0 : i32
    %c0_i32_1 = arith.constant 0 : i32
    return %c0_i32, %c0_i32_0 : i32, i32
  }
  func.func @transform_12(%arg0: i32) -> (i32, i32) {
    %c0_i32 = arith.constant 0 : i32
    %c0_i32_0 = arith.constant 0 : i32
    %c0_i32_1 = arith.constant 0 : i32
    return %c0_i32, %c0_i32_0 : i32, i32
  }
  func.func @transform_13(%arg0: i32) -> (i32, i32) {
    %c0_i32 = arith.constant 0 : i32
    %c0_i32_0 = arith.constant 0 : i32
    %c0_i32_1 = arith.constant 0 : i32
    return %c0_i32, %c0_i32_0 : i32, i32
  }
  func.func @transform_14(%arg0: i32) -> (i32, i32) {
    %c0_i32 = arith.constant 0 : i32
    %c0_i32_0 = arith.constant 0 : i32
    %c0_i32_1 = arith.constant 0 : i32
    return %c0_i32, %c0_i32_0 : i32, i32
  }
  func.func @transform_15(%arg0: i32) -> (i32, i32) {
    %c0_i32 = arith.constant 0 : i32
    %c0_i32_0 = arith.constant 0 : i32
    %c0_i32_1 = arith.constant 0 : i32
    return %c0_i32, %c0_i32_0 : i32, i32
  }
  func.func @transform_16(%arg0: i32) -> (i32, i32, i32) {
    %c0_i32 = arith.constant 0 : i32
    %c0_i32_0 = arith.constant 0 : i32
    %c0_i32_1 = arith.constant 0 : i32
    return %arg0, %c0_i32, %c0_i32_0 : i32, i32, i32
  }
}

</mosaic_0001>

<llo_original>
// kernel: tpu_custom_call.1
$region0: #{tpu_custom_call.1}
  #allocation0 [shape = 'u32[]', space=smem, size = 0x4, offset = 0x4, fixed_abs, tag = 'smem constant byte address 0x4 - core index']
  #allocation1 [shape = 'u32[144,128]{1,0:T(1,128)}', space=vmem, size = 0x12000, scoped, tag = 'internal scratch']
  %s0 = inlined_call_operand.hbm [shape: f32[7,8,32], index: 0, kind: input, shape index: {}]
  %s1 = inlined_call_operand.hbm [shape: f32[7,1,8], index: 1, kind: input, shape index: {}]
  %s2 = inlined_call_operand.hbm [shape: f32[1,32], index: 2, kind: input, shape index: {}]
  %s3 = inlined_call_operand.hbm [shape: f32[1,32], index: 3, kind: input, shape index: {}]
  %s4 = inlined_call_operand.vmem [shape: bf16[2,3,32,32], index: 4, kind: input, shape index: {}]
  %s5 = inlined_call_operand.vmem [shape: f32[2,3,32], index: 5, kind: input, shape index: {}]
  %s6 = inlined_call_operand.hbm [shape: bf16[2,32,32], index: 6, kind: input, shape index: {}]
  %s7 = inlined_call_operand.hbm [shape: f32[2,32], index: 7, kind: input, shape index: {}]
  %s8 = inlined_call_operand.hbm [shape: bf16[2,32,64], index: 8, kind: input, shape index: {}]
  %s9 = inlined_call_operand.hbm [shape: f32[2,64], index: 9, kind: input, shape index: {}]
  %s10 = inlined_call_operand.vmem [shape: bf16[2,64,32], index: 10, kind: input, shape index: {}]
  %s11 = inlined_call_operand.vmem [shape: f32[2,32], index: 11, kind: input, shape index: {}]
  %s12 = inlined_call_operand.hbm [shape: f32[2,32], index: 12, kind: input, shape index: {}]
  %s13 = inlined_call_operand.vmem [shape: f32[2,32], index: 13, kind: input, shape index: {}]
  %s14 = inlined_call_operand.vmem [shape: f32[2,32], index: 14, kind: input, shape index: {}]
  %s15 = inlined_call_operand.vmem [shape: f32[2,32], index: 15, kind: input, shape index: {}]
  %s16 = inlined_call_operand.hbm [shape: f32[7,8,32], index: 16, kind: output, shape index: {}]
  %s17 = sld [smem:[#allocation0]]
  $region133: #{tpu_custom_call.1} parent=0
    _
  %s19 = ssub.s32 1, %s17
  %s20 = scalar_select 0, %s19, %s17
  $region1: #{tpu_custom_call.1} parent=0
    #allocation2 [shape = 'u8[8192]{0}', space=vmem, size = 0x2000, scoped, tag = 'input window, operand 0']
    #allocation3 [shape = 's32[2]{0}', space=sflag, size = 0x8, scoped, tag = 'scoped memory for tpu_custom_call.1']
    #allocation4 [shape = 's32[2]{0}', space=sflag, size = 0x8, scoped, tag = 'scoped memory for tpu_custom_call.1']
    #allocation5 [shape = 'u8[1024]{0}', space=vmem, size = 0x400, scoped, tag = 'input window, operand 1']
    #allocation6 [shape = 's32[2]{0}', space=sflag, size = 0x8, scoped, tag = 'scoped memory for tpu_custom_call.1']
    #allocation7 [shape = 'u8[512]{0}', space=vmem, size = 0x400, scoped, tag = 'input window, operand 2, single buffered']
    #allocation8 [shape = 'u8[512]{0}', space=vmem, size = 0x400, scoped, tag = 'input window, operand 3, single buffered']
    #allocation9 [shape = 's32[1]{0}', space=sflag, size = 0x4, scoped, tag = 'scoped memory for tpu_custom_call.1']
    #allocation10 [shape = 'u8[16384]{0}', space=vmem, size = 0x4000, scoped, tag = 'input window, operand 6, single buffered']
    #allocation11 [shape = 'u8[1024]{0}', space=vmem, size = 0x400, scoped, tag = 'input window, operand 7, single buffered']
    #allocation12 [shape = 's32[1]{0}', space=sflag, size = 0x4, scoped, tag = 'scoped memory for tpu_custom_call.1']
    #allocation13 [shape = 'u8[16384]{0}', space=vmem, size = 0x4000, scoped, tag = 'input window, operand 8, single buffered']
    #allocation14 [shape = 'u8[1024]{0}', space=vmem, size = 0x400, scoped, tag = 'input window, operand 9, single buffered']
    #allocation15 [shape = 's32[1]{0}', space=sflag, size = 0x4, scoped, tag = 'scoped memory for tpu_custom_call.1']
    #allocation16 [shape = 'u8[1024]{0}', space=vmem, size = 0x400, scoped, tag = 'input window, operand 12, single buffered']
    #allocation17 [shape = 'u8[8192]{0}', space=vmem, size = 0x2000, scoped, tag = 'output window, operand 0']
    %21 = vsyncpa [#allocation3], 0
    %s22 = scalar_lea.sflag [#allocation3], 1
    %23 = vsyncpa %s22, 0
    %24 = vsyncpa [#allocation6], 0
    %s25 = scalar_lea.sflag [#allocation6], 1
    %26 = vsyncpa %s25, 0
    %27 = vsyncpa [#allocation9], 0
    %28 = vsyncpa [#allocation12], 0
    %29 = vsyncpa [#allocation15], 0
    %30 = vsyncpa [#allocation4], 0
    %s31 = scalar_lea.sflag [#allocation4], 1
    %32 = vsyncpa %s31, 0
    loop: start=0, step=1, limit=9
    $region2: #{tpu_custom_call.1} parent=1 // loop_pre_header
      _
    $region3: #{tpu_custom_call.1} parent=1 // loop_header
      %s34 = sphi 0, %s38
      %p35 = scmp.ge.s32.totalorder %s34, 9
      %s44 = sphi 0, %s46
      %s47 = sphi 0, %s44
      %s48 = sphi 0, %s47
      %s64 = sphi 0, %s48
      %s70 = sphi 0, %s72
      %s73 = sphi 0, %s70
      %s74 = sphi 0, %s73
      %s90 = sphi 0, %s74
      %s94 = sphi 0, %s94
      %s96 = sphi 0, %s94
      %s97 = sphi 0, %s96
      %s111 = sphi 0, %s97
      %s115 = sphi 0, %s115
      %s117 = sphi 0, %s115
      %s118 = sphi 0, %s117
      %s132 = sphi 0, %s118
      %s136 = sphi 0, %s136
      %s138 = sphi 0, %s136
      %s139 = sphi 0, %s138
      %s153 = sphi 0, %s139
      %s157 = sphi 0, %s157
      %s159 = sphi 0, %s157
      %s160 = sphi 0, %s159
      %s174 = sphi 0, %s160
      %s178 = sphi 0, %s178
      %s180 = sphi 0, %s178
      %s181 = sphi 0, %s180
      %s195 = sphi 0, %s181
      %s199 = sphi 0, %s199
      %s201 = sphi 0, %s199
      %s202 = sphi 0, %s201
      %s216 = sphi 0, %s202
      %s220 = sphi 0, %s220
      %s222 = sphi 0, %s220
      %s223 = sphi 0, %s222
      %s237 = sphi 0, %s223
      %s241 = sphi 0, %s241
      %s243 = sphi 0, %s241
      %s244 = sphi 0, %s243
      %s258 = sphi 0, %s244
      %s262 = sphi 0, %s262
      %s264 = sphi 0, %s262
      %s265 = sphi 0, %s264
      %s279 = sphi 0, %s265
      %s283 = sphi 0, %s283
      %s285 = sphi 0, %s283
      %s286 = sphi 0, %s285
      %s300 = sphi 0, %s286
      %s304 = sphi 0, %s304
      %s306 = sphi 0, %s304
      %s307 = sphi 0, %s306
      %s321 = sphi 0, %s307
      %s325 = sphi 0, %s325
      %s327 = sphi 0, %s325
      %s328 = sphi 0, %s327
      %s342 = sphi 0, %s328
      %s346 = sphi 0, %s346
      %s348 = sphi 0, %s346
      %s349 = sphi 0, %s348
      %s363 = sphi 0, %s349
      %s367 = sphi 0, %s367
      %s369 = sphi 0, %s367
      %s370 = sphi 0, %s369
      %s384 = sphi 0, %s370
      %s390 = sphi 0, %s392
      %s393 = sphi 0, %s390
      %s394 = sphi 0, %s393
      %s410 = sphi 0, %s394
    $region4: #{tpu_custom_call.1} parent=1 // loop_header_branch
      %37 = sbr.rel (%p35) target = $region8
    $region5: #{tpu_custom_call.1} parent=1 // loop_body
      %s39 = ssub.s32 %s34, 1
      %s40 = ssub.s32 %s34, 2
      %s41 = sadd.s32 %s34, 1
      %s42 = ssub.s32 %s34, %s41
      %p43 = scmp.eq.s32.totalorder %s42, 0
      %s45 = sadd.s32 %s44, 1
      %s46 = scalar_select %p43, %s44, %s45
      %p49 = pneg %p43
      %p50 = scmp.eq.s32.totalorder %s34, 6
      %p51 = por %p49, %p50
      %p52 = scmp.ne.s32.totalorder %s44, %s47
      %p53 = scmp.eq.s32.totalorder %s34, 0
      %p54 = por %p52, %p53
      %p55 = scmp.ne.s32.totalorder %s44, %s47
      %p56 = scmp.eq.s32.totalorder %s39, 6
      %p57 = por %p55, %p56
      %p58 = scmp.ne.s32.totalorder %s47, %s48
      %p59 = scmp.eq.s32.totalorder %s39, 0
      %p60 = por %p58, %p59
      %p61 = scmp.ne.s32.totalorder %s47, %s48
      %p62 = scmp.eq.s32.totalorder %s40, 6
      %p63 = por %p61, %p62
      %p65 = scmp.ne.s32.totalorder %s48, %s64
      %p66 = scmp.eq.s32.totalorder %s40, 0
      %p67 = por %p65, %p66
      %s68 = ssub.s32 %s34, %s41
      %p69 = scmp.eq.s32.totalorder %s68, 0
      %s71 = sadd.s32 %s70, 1
      %s72 = scalar_select %p69, %s70, %s71
      %p75 = pneg %p69
      %p76 = scmp.eq.s32.totalorder %s34, 6
      %p77 = por %p75, %p76
      %p78 = scmp.ne.s32.totalorder %s70, %s73
      %p79 = scmp.eq.s32.totalorder %s34, 0
      %p80 = por %p78, %p79
      %p81 = scmp.ne.s32.totalorder %s70, %s73
      %p82 = scmp.eq.s32.totalorder %s39, 6
      %p83 = por %p81, %p82
      %p84 = scmp.ne.s32.totalorder %s73, %s74
      %p85 = scmp.eq.s32.totalorder %s39, 0
      %p86 = por %p84, %p85
      %p87 = scmp.ne.s32.totalorder %s73, %s74
      %p88 = scmp.eq.s32.totalorder %s40, 6
      %p89 = por %p87, %p88
      %p91 = scmp.ne.s32.totalorder %s74, %s90
      %p92 = scmp.eq.s32.totalorder %s40, 0
      %p93 = por %p91, %p92
      %s95 = sadd.s32 %s94, 1
      %p98 = scmp.eq.s32.totalorder %s34, 6
      %p99 = scmp.ne.s32.totalorder %s94, %s96
      %p100 = scmp.eq.s32.totalorder %s34, 0
      %p101 = por %p99, %p100
      %p102 = scmp.ne.s32.totalorder %s94, %s96
      %p103 = scmp.eq.s32.totalorder %s39, 6
      %p104 = por %p102, %p103
      %p105 = scmp.ne.s32.totalorder %s96, %s97
      %p106 = scmp.eq.s32.totalorder %s39, 0
      %p107 = por %p105, %p106
      %p108 = scmp.ne.s32.totalorder %s96, %s97
      %p109 = scmp.eq.s32.totalorder %s40, 6
      %p110 = por %p108, %p109
      %p112 = scmp.ne.s32.totalorder %s97, %s111
      %p113 = scmp.eq.s32.totalorder %s40, 0
      %p114 = por %p112, %p113
      %s116 = sadd.s32 %s115, 1
      %p119 = scmp.eq.s32.totalorder %s34, 6
      %p120 = scmp.ne.s32.totalorder %s115, %s117
      %p121 = scmp.eq.s32.totalorder %s34, 0
      %p122 = por %p120, %p121
      %p123 = scmp.ne.s32.totalorder %s115, %s117
      %p124 = scmp.eq.s32.totalorder %s39, 6
      %p125 = por %p123, %p124
      %p126 = scmp.ne.s32.totalorder %s117, %s118
      %p127 = scmp.eq.s32.totalorder %s39, 0
      %p128 = por %p126, %p127
      %p129 = scmp.ne.s32.totalorder %s117, %s118
      %p130 = scmp.eq.s32.totalorder %s40, 6
      %p131 = por %p129, %p130
      %p133 = scmp.ne.s32.totalorder %s118, %s132
      %p134 = scmp.eq.s32.totalorder %s40, 0
      %p135 = por %p133, %p134
      %s137 = sadd.s32 %s136, 1
      %p140 = scmp.eq.s32.totalorder %s34, 6
      %p141 = scmp.ne.s32.totalorder %s136, %s138
      %p142 = scmp.eq.s32.totalorder %s34, 0
      %p143 = por %p141, %p142
      %p144 = scmp.ne.s32.totalorder %s136, %s138
      %p145 = scmp.eq.s32.totalorder %s39, 6
      %p146 = por %p144, %p145
      %p147 = scmp.ne.s32.totalorder %s138, %s139
      %p148 = scmp.eq.s32.totalorder %s39, 0
      %p149 = por %p147, %p148
      %p150 = scmp.ne.s32.totalorder %s138, %s139
      %p151 = scmp.eq.s32.totalorder %s40, 6
      %p152 = por %p150, %p151
      %p154 = scmp.ne.s32.totalorder %s139, %s153
      %p155 = scmp.eq.s32.totalorder %s40, 0
      %p156 = por %p154, %p155
      %s158 = sadd.s32 %s157, 1
      %p161 = scmp.eq.s32.totalorder %s34, 6
      %p162 = scmp.ne.s32.totalorder %s157, %s159
      %p163 = scmp.eq.s32.totalorder %s34, 0
      %p164 = por %p162, %p163
      %p165 = scmp.ne.s32.totalorder %s157, %s159
      %p166 = scmp.eq.s32.totalorder %s39, 6
      %p167 = por %p165, %p166
      %p168 = scmp.ne.s32.totalorder %s159, %s160
      %p169 = scmp.eq.s32.totalorder %s39, 0
      %p170 = por %p168, %p169
      %p171 = scmp.ne.s32.totalorder %s159, %s160
      %p172 = scmp.eq.s32.totalorder %s40, 6
      %p173 = por %p171, %p172
      %p175 = scmp.ne.s32.totalorder %s160, %s174
      %p176 = scmp.eq.s32.totalorder %s40, 0
      %p177 = por %p175, %p176
      %s179 = sadd.s32 %s178, 1
      %p182 = scmp.eq.s32.totalorder %s34, 6
      %p183 = scmp.ne.s32.totalorder %s178, %s180
      %p184 = scmp.eq.s32.totalorder %s34, 0
      %p185 = por %p183, %p184
      %p186 = scmp.ne.s32.totalorder %s178, %s180
      %p187 = scmp.eq.s32.totalorder %s39, 6
      %p188 = por %p186, %p187
      %p189 = scmp.ne.s32.totalorder %s180, %s181
      %p190 = scmp.eq.s32.totalorder %s39, 0
      %p191 = por %p189, %p190
      %p192 = scmp.ne.s32.totalorder %s180, %s181
      %p193 = scmp.eq.s32.totalorder %s40, 6
      %p194 = por %p192, %p193
      %p196 = scmp.ne.s32.totalorder %s181, %s195
      %p197 = scmp.eq.s32.totalorder %s40, 0
      %p198 = por %p196, %p197
      %s200 = sadd.s32 %s199, 1
      %p203 = scmp.eq.s32.totalorder %s34, 6
      %p204 = scmp.ne.s32.totalorder %s199, %s201
      %p205 = scmp.eq.s32.totalorder %s34, 0
      %p206 = por %p204, %p205
      %p207 = scmp.ne.s32.totalorder %s199, %s201
      %p208 = scmp.eq.s32.totalorder %s39, 6
      %p209 = por %p207, %p208
      %p210 = scmp.ne.s32.totalorder %s201, %s202
      %p211 = scmp.eq.s32.totalorder %s39, 0
      %p212 = por %p210, %p211
      %p213 = scmp.ne.s32.totalorder %s201, %s202
      %p214 = scmp.eq.s32.totalorder %s40, 6
      %p215 = por %p213, %p214
      %p217 = scmp.ne.s32.totalorder %s202, %s216
      %p218 = scmp.eq.s32.totalorder %s40, 0
      %p219 = por %p217, %p218
      %s221 = sadd.s32 %s220, 1
      %p224 = scmp.eq.s32.totalorder %s34, 6
      %p225 = scmp.ne.s32.totalorder %s220, %s222
      %p226 = scmp.eq.s32.totalorder %s34, 0
      %p227 = por %p225, %p226
      %p228 = scmp.ne.s32.totalorder %s220, %s222
      %p229 = scmp.eq.s32.totalorder %s39, 6
      %p230 = por %p228, %p229
      %p231 = scmp.ne.s32.totalorder %s222, %s223
      %p232 = scmp.eq.s32.totalorder %s39, 0
      %p233 = por %p231, %p232
      %p234 = scmp.ne.s32.totalorder %s222, %s223
      %p235 = scmp.eq.s32.totalorder %s40, 6
      %p236 = por %p234, %p235
      %p238 = scmp.ne.s32.totalorder %s223, %s237
      %p239 = scmp.eq.s32.totalorder %s40, 0
      %p240 = por %p238, %p239
      %s242 = sadd.s32 %s241, 1
      %p245 = scmp.eq.s32.totalorder %s34, 6
      %p246 = scmp.ne.s32.totalorder %s241, %s243
      %p247 = scmp.eq.s32.totalorder %s34, 0
      %p248 = por %p246, %p247
      %p249 = scmp.ne.s32.totalorder %s241, %s243
      %p250 = scmp.eq.s32.totalorder %s39, 6
      %p251 = por %p249, %p250
      %p252 = scmp.ne.s32.totalorder %s243, %s244
      %p253 = scmp.eq.s32.totalorder %s39, 0
      %p254 = por %p252, %p253
      %p255 = scmp.ne.s32.totalorder %s243, %s244
      %p256 = scmp.eq.s32.totalorder %s40, 6
      %p257 = por %p255, %p256
      %p259 = scmp.ne.s32.totalorder %s244, %s258
      %p260 = scmp.eq.s32.totalorder %s40, 0
      %p261 = por %p259, %p260
      %s263 = sadd.s32 %s262, 1
      %p266 = scmp.eq.s32.totalorder %s34, 6
      %p267 = scmp.ne.s32.totalorder %s262, %s264
      %p268 = scmp.eq.s32.totalorder %s34, 0
      %p269 = por %p267, %p268
      %p270 = scmp.ne.s32.totalorder %s262, %s264
      %p271 = scmp.eq.s32.totalorder %s39, 6
      %p272 = por %p270, %p271
      %p273 = scmp.ne.s32.totalorder %s264, %s265
      %p274 = scmp.eq.s32.totalorder %s39, 0
      %p275 = por %p273, %p274
      %p276 = scmp.ne.s32.totalorder %s264, %s265
      %p277 = scmp.eq.s32.totalorder %s40, 6
      %p278 = por %p276, %p277
      %p280 = scmp.ne.s32.totalorder %s265, %s279
      %p281 = scmp.eq.s32.totalorder %s40, 0
      %p282 = por %p280, %p281
      %s284 = sadd.s32 %s283, 1
      %p287 = scmp.eq.s32.totalorder %s34, 6
      %p288 = scmp.ne.s32.totalorder %s283, %s285
      %p289 = scmp.eq.s32.totalorder %s34, 0
      %p290 = por %p288, %p289
      %p291 = scmp.ne.s32.totalorder %s283, %s285
      %p292 = scmp.eq.s32.totalorder %s39, 6
      %p293 = por %p291, %p292
      %p294 = scmp.ne.s32.totalorder %s285, %s286
      %p295 = scmp.eq.s32.totalorder %s39, 0
      %p296 = por %p294, %p295
      %p297 = scmp.ne.s32.totalorder %s285, %s286
      %p298 = scmp.eq.s32.totalorder %s40, 6
      %p299 = por %p297, %p298
      %p301 = scmp.ne.s32.totalorder %s286, %s300
      %p302 = scmp.eq.s32.totalorder %s40, 0
      %p303 = por %p301, %p302
      %s305 = sadd.s32 %s304, 1
      %p308 = scmp.eq.s32.totalorder %s34, 6
      %p309 = scmp.ne.s32.totalorder %s304, %s306
      %p310 = scmp.eq.s32.totalorder %s34, 0
      %p311 = por %p309, %p310
      %p312 = scmp.ne.s32.totalorder %s304, %s306
      %p313 = scmp.eq.s32.totalorder %s39, 6
      %p314 = por %p312, %p313
      %p315 = scmp.ne.s32.totalorder %s306, %s307
      %p316 = scmp.eq.s32.totalorder %s39, 0
      %p317 = por %p315, %p316
      %p318 = scmp.ne.s32.totalorder %s306, %s307
      %p319 = scmp.eq.s32.totalorder %s40, 6
      %p320 = por %p318, %p319
      %p322 = scmp.ne.s32.totalorder %s307, %s321
      %p323 = scmp.eq.s32.totalorder %s40, 0
      %p324 = por %p322, %p323
      %s326 = sadd.s32 %s325, 1
      %p329 = scmp.eq.s32.totalorder %s34, 6
      %p330 = scmp.ne.s32.totalorder %s325, %s327
      %p331 = scmp.eq.s32.totalorder %s34, 0
      %p332 = por %p330, %p331
      %p333 = scmp.ne.s32.totalorder %s325, %s327
      %p334 = scmp.eq.s32.totalorder %s39, 6
      %p335 = por %p333, %p334
      %p336 = scmp.ne.s32.totalorder %s327, %s328
      %p337 = scmp.eq.s32.totalorder %s39, 0
      %p338 = por %p336, %p337
      %p339 = scmp.ne.s32.totalorder %s327, %s328
      %p340 = scmp.eq.s32.totalorder %s40, 6
      %p341 = por %p339, %p340
      %p343 = scmp.ne.s32.totalorder %s328, %s342
      %p344 = scmp.eq.s32.totalorder %s40, 0
      %p345 = por %p343, %p344
      %s347 = sadd.s32 %s346, 1
      %p350 = scmp.eq.s32.totalorder %s34, 6
      %p351 = scmp.ne.s32.totalorder %s346, %s348
      %p352 = scmp.eq.s32.totalorder %s34, 0
      %p353 = por %p351, %p352
      %p354 = scmp.ne.s32.totalorder %s346, %s348
      %p355 = scmp.eq.s32.totalorder %s39, 6
      %p356 = por %p354, %p355
      %p357 = scmp.ne.s32.totalorder %s348, %s349
      %p358 = scmp.eq.s32.totalorder %s39, 0
      %p359 = por %p357, %p358
      %p360 = scmp.ne.s32.totalorder %s348, %s349
      %p361 = scmp.eq.s32.totalorder %s40, 6
      %p362 = por %p360, %p361
      %p364 = scmp.ne.s32.totalorder %s349, %s363
      %p365 = scmp.eq.s32.totalorder %s40, 0
      %p366 = por %p364, %p365
      %s368 = sadd.s32 %s367, 1
      %p371 = scmp.eq.s32.totalorder %s34, 6
      %p372 = scmp.ne.s32.totalorder %s367, %s369
      %p373 = scmp.eq.s32.totalorder %s34, 0
      %p374 = por %p372, %p373
      %p375 = scmp.ne.s32.totalorder %s367, %s369
      %p376 = scmp.eq.s32.totalorder %s39, 6
      %p377 = por %p375, %p376
      %p378 = scmp.ne.s32.totalorder %s369, %s370
      %p379 = scmp.eq.s32.totalorder %s39, 0
      %p380 = por %p378, %p379
      %p381 = scmp.ne.s32.totalorder %s369, %s370
      %p382 = scmp.eq.s32.totalorder %s40, 6
      %p383 = por %p381, %p382
      %p385 = scmp.ne.s32.totalorder %s370, %s384
      %p386 = scmp.eq.s32.totalorder %s40, 0
      %p387 = por %p385, %p386
      %s388 = ssub.s32 %s34, %s41
      %p389 = scmp.eq.s32.totalorder %s388, 0
      %s391 = sadd.s32 %s390, 1
      %s392 = scalar_select %p389, %s390, %s391
      %p395 = pneg %p389
      %p396 = scmp.eq.s32.totalorder %s34, 6
      %p397 = por %p395, %p396
      %p398 = scmp.ne.s32.totalorder %s390, %s393
      %p399 = scmp.eq.s32.totalorder %s34, 0
      %p400 = por %p398, %p399
      %p401 = scmp.ne.s32.totalorder %s390, %s393
      %p402 = scmp.eq.s32.totalorder %s39, 6
      %p403 = por %p401, %p402
      %p404 = scmp.ne.s32.totalorder %s393, %s394
      %p405 = scmp.eq.s32.totalorder %s39, 0
      %p406 = por %p404, %p405
      %p407 = scmp.ne.s32.totalorder %s393, %s394
      %p408 = scmp.eq.s32.totalorder %s40, 6
      %p409 = por %p407, %p408
      %p411 = scmp.ne.s32.totalorder %s394, %s410
      %p412 = scmp.eq.s32.totalorder %s40, 0
      %p413 = por %p411, %p412
      %p414 = scmp.le.s32.totalorder 1, %s34
      %p415 = scmp.lt.s32.totalorder %s34, 8
      %p416 = pnand %p414, %p415
      %p417 = pneg %p416
      // Predicated region
      $region9: #{tpu_custom_call.1} parent=5 // pred_check
        _
      $region10: #{tpu_custom_call.1} parent=5 // pred_check_branch
        %419 = sbr.rel (%p416) target = $region12
      $region11: #{tpu_custom_call.1} parent=5 // pred_region
        %s420 = ssub.s32 %s34, 1
        // Predicated region
        $region13: #{tpu_custom_call.1} parent=11 // pred_check
          %p421 = pneg %p107
        $region14: #{tpu_custom_call.1} parent=11 // pred_check_branch
          %423 = sbr.rel (%p421) target = $region16
        $region15: #{tpu_custom_call.1} parent=11 // pred_region
          %s425 = ssub.s32 16, 16
          %426 = vsyncadd [#allocation6], %s425
          %s428 = sshll.u32 [#allocation7], 4
          %s429 = int_to_ptr.vmem [resolvable:$true] %s428
          %431 = dma.hbm_to_vmem [thread:$0]  %s2, 16, %s429, [#allocation6]
        $region16: #{tpu_custom_call.1} parent=11 // pred_fallthru
          _
        // Predicated region
        $region17: #{tpu_custom_call.1} parent=11 // pred_check
          %p432 = pneg %p128
        $region18: #{tpu_custom_call.1} parent=11 // pred_check_branch
          %434 = sbr.rel (%p432) target = $region20
        $region19: #{tpu_custom_call.1} parent=11 // pred_region
          %s436 = ssub.s32 16, 16
          %437 = vsyncadd [#allocation9], %s436
          %s439 = sshll.u32 [#allocation8], 4
          %s440 = int_to_ptr.vmem [resolvable:$true] %s439
          %442 = dma.hbm_to_vmem [thread:$0]  %s3, 16, %s440, [#allocation9]
        $region20: #{tpu_custom_call.1} parent=11 // pred_fallthru
          _
        // Predicated region
        $region21: #{tpu_custom_call.1} parent=11 // pred_check
          %p443 = pneg %p149
        $region22: #{tpu_custom_call.1} parent=11 // pred_check_branch
          %445 = sbr.rel (%p443) target = $region24
        $region23: #{tpu_custom_call.1} parent=11 // pred_region
          _
        $region24: #{tpu_custom_call.1} parent=11 // pred_fallthru
          _
        // Predicated region
        $region25: #{tpu_custom_call.1} parent=11 // pred_check
          %p446 = pneg %p170
        $region26: #{tpu_custom_call.1} parent=11 // pred_check_branch
          %448 = sbr.rel (%p446) target = $region28
        $region27: #{tpu_custom_call.1} parent=11 // pred_region
          _
        $region28: #{tpu_custom_call.1} parent=11 // pred_fallthru
          _
        // Predicated region
        $region29: #{tpu_custom_call.1} parent=11 // pred_check
          %p449 = pneg %p191
        $region30: #{tpu_custom_call.1} parent=11 // pred_check_branch
          %451 = sbr.rel (%p449) target = $region32
        $region31: #{tpu_custom_call.1} parent=11 // pred_region
          %s453 = ssub.s32 512, 512
          %454 = vsyncadd [#allocation9], %s453
          %s455 = sshll.u32 [#allocation10], 4
          %s456 = int_to_ptr.vmem [resolvable:$true] %s455
          %461 = dma.hbm_to_vmem [thread:$0]  %s6, 512, %s456, [#allocation9], 64, 64, 4
        $region32: #{tpu_custom_call.1} parent=11 // pred_fallthru
          _
        // Predicated region
        $region33: #{tpu_custom_call.1} parent=11 // pred_check
          %p462 = pneg %p212
        $region34: #{tpu_custom_call.1} parent=11 // pred_check_branch
          %464 = sbr.rel (%p462) target = $region36
        $region35: #{tpu_custom_call.1} parent=11 // pred_region
          %s466 = ssub.s32 32, 32
          %467 = vsyncadd [#allocation12], %s466
          %s469 = sshll.u32 [#allocation11], 4
          %s470 = int_to_ptr.vmem [resolvable:$true] %s469
          %472 = dma.hbm_to_vmem [thread:$0]  %s7, 32, %s470, [#allocation12]
        $region36: #{tpu_custom_call.1} parent=11 // pred_fallthru
          _
        // Predicated region
        $region37: #{tpu_custom_call.1} parent=11 // pred_check
          %p473 = pneg %p233
        $region38: #{tpu_custom_call.1} parent=11 // pred_check_branch
          %475 = sbr.rel (%p473) target = $region40
        $region39: #{tpu_custom_call.1} parent=11 // pred_region
          %s477 = ssub.s32 512, 512
          %478 = vsyncadd [#allocation12], %s477
          %s479 = sshll.u32 [#allocation13], 4
          %s480 = int_to_ptr.vmem [resolvable:$true] %s479
          %485 = dma.hbm_to_vmem [thread:$0]  %s8, 512, %s480, [#allocation12], 64, 64, 4
        $region40: #{tpu_custom_call.1} parent=11 // pred_fallthru
          _
        // Predicated region
        $region41: #{tpu_custom_call.1} parent=11 // pred_check
          %p486 = pneg %p254
        $region42: #{tpu_custom_call.1} parent=11 // pred_check_branch
          %488 = sbr.rel (%p486) target = $region44
        $region43: #{tpu_custom_call.1} parent=11 // pred_region
          %s490 = ssub.s32 32, 32
          %491 = vsyncadd [#allocation15], %s490
          %s493 = sshll.u32 [#allocation14], 4
          %s494 = int_to_ptr.vmem [resolvable:$true] %s493
          %496 = dma.hbm_to_vmem [thread:$0]  %s9, 32, %s494, [#allocation15]
        $region44: #{tpu_custom_call.1} parent=11 // pred_fallthru
          _
        // Predicated region
        $region45: #{tpu_custom_call.1} parent=11 // pred_check
          %p497 = pneg %p275
        $region46: #{tpu_custom_call.1} parent=11 // pred_check_branch
          %499 = sbr.rel (%p497) target = $region48
        $region47: #{tpu_custom_call.1} parent=11 // pred_region
          _
        $region48: #{tpu_custom_call.1} parent=11 // pred_fallthru
          _
        // Predicated region
        $region49: #{tpu_custom_call.1} parent=11 // pred_check
          %p500 = pneg %p296
        $region50: #{tpu_custom_call.1} parent=11 // pred_check_branch
          %502 = sbr.rel (%p500) target = $region52
        $region51: #{tpu_custom_call.1} parent=11 // pred_region
          _
        $region52: #{tpu_custom_call.1} parent=11 // pred_fallthru
          _
        // Predicated region
        $region53: #{tpu_custom_call.1} parent=11 // pred_check
          %p503 = pneg %p317
        $region54: #{tpu_custom_call.1} parent=11 // pred_check_branch
          %505 = sbr.rel (%p503) target = $region56
        $region55: #{tpu_custom_call.1} parent=11 // pred_region
          %s507 = ssub.s32 32, 32
          %508 = vsyncadd [#allocation15], %s507
          %s510 = sshll.u32 [#allocation16], 4
          %s511 = int_to_ptr.vmem [resolvable:$true] %s510
          %513 = dma.hbm_to_vmem [thread:$0]  %s12, 32, %s511, [#allocation15]
        $region56: #{tpu_custom_call.1} parent=11 // pred_fallthru
          _
        // Predicated region
        $region57: #{tpu_custom_call.1} parent=11 // pred_check
          %p514 = pneg %p338
        $region58: #{tpu_custom_call.1} parent=11 // pred_check_branch
          %516 = sbr.rel (%p514) target = $region60
        $region59: #{tpu_custom_call.1} parent=11 // pred_region
          _
        $region60: #{tpu_custom_call.1} parent=11 // pred_fallthru
          _
        // Predicated region
        $region61: #{tpu_custom_call.1} parent=11 // pred_check
          %p517 = pneg %p359
        $region62: #{tpu_custom_call.1} parent=11 // pred_check_branch
          %519 = sbr.rel (%p517) target = $region64
        $region63: #{tpu_custom_call.1} parent=11 // pred_region
          _
        $region64: #{tpu_custom_call.1} parent=11 // pred_fallthru
          _
        // Predicated region
        $region65: #{tpu_custom_call.1} parent=11 // pred_check
          %p520 = pneg %p380
        $region66: #{tpu_custom_call.1} parent=11 // pred_check_branch
          %522 = sbr.rel (%p520) target = $region68
        $region67: #{tpu_custom_call.1} parent=11 // pred_region
          _
        $region68: #{tpu_custom_call.1} parent=11 // pred_fallthru
          _
      $region12: #{tpu_custom_call.1} parent=5 // pred_fallthru
        _
      %p523 = scmp.lt.s32.totalorder %s34, 7
      // Predicated region
      $region69: #{tpu_custom_call.1} parent=5 // pred_check
        %p524 = pneg %p523
      $region70: #{tpu_custom_call.1} parent=5 // pred_check_branch
        %526 = sbr.rel (%p524) target = $region72
      $region71: #{tpu_custom_call.1} parent=5 // pred_region
        // Predicated region
        $region73: #{tpu_custom_call.1} parent=71 // pred_check
          %p527 = pneg %p54
        $region74: #{tpu_custom_call.1} parent=71 // pred_check_branch
          %529 = sbr.rel (%p527) target = $region76
        $region75: #{tpu_custom_call.1} parent=71 // pred_region
          %s530 = sand.u32 %s44, 1
          %s531 = scalar_lea.sflag [#allocation3], %s530
          %s532 = sand.u32 %s44, 1
          %s533 = smul.addr %s532, 8
          %s534 = scalar_lea.vmem [#allocation2], %s533
          %s536 = ssub.s32 128, 128
          %537 = vsyncadd %s531, %s536
          %s538 = smul.addr %s34, 128
          %s539 = scalar_lea.hbm %s0, %s538
          %s541 = sshll.u32 %s534, 4
          %s542 = int_to_ptr.vmem [resolvable:$true] %s541
          %544 = dma.hbm_to_vmem [thread:$0]  %s539, 128, %s542, %s531
        $region76: #{tpu_custom_call.1} parent=71 // pred_fallthru
          _
        // Predicated region
        $region77: #{tpu_custom_call.1} parent=71 // pred_check
          %p545 = pneg %p80
        $region78: #{tpu_custom_call.1} parent=71 // pred_check_branch
          %547 = sbr.rel (%p545) target = $region80
        $region79: #{tpu_custom_call.1} parent=71 // pred_region
          %s548 = sand.u32 %s34, 1
          %s549 = scalar_lea.sflag [#allocation6], %s548
          %s550 = sand.u32 %s70, 1
          %s551 = scalar_lea.vmem [#allocation5], %s550
          %s553 = ssub.s32 16, 16
          %554 = vsyncadd %s549, %s553
          %s555 = smul.addr %s34, 16
          %s556 = scalar_lea.hbm %s1, %s555
          %s558 = sshll.u32 %s551, 4
          %s559 = int_to_ptr.vmem [resolvable:$true] %s558
          %561 = dma.hbm_to_vmem [thread:$0]  %s556, 16, %s559, %s549
        $region80: #{tpu_custom_call.1} parent=71 // pred_fallthru
          _
      $region72: #{tpu_custom_call.1} parent=5 // pred_fallthru
        _
      %p562 = scmp.le.s32.totalorder 1, %s34
      %p563 = scmp.lt.s32.totalorder %s34, 8
      %p564 = pnand %p562, %p563
      %p565 = pneg %p564
      // Predicated region
      $region81: #{tpu_custom_call.1} parent=5 // pred_check
        _
      $region82: #{tpu_custom_call.1} parent=5 // pred_check_branch
        %567 = sbr.rel (%p564) target = $region84
      $region83: #{tpu_custom_call.1} parent=5 // pred_region
        %s568 = ssub.s32 %s34, 1
        %s569 = sand.u32 %s47, 1
        %s570 = scalar_lea.sflag [#allocation3], %s569
        %s571 = sand.u32 %s47, 1
        %s572 = smul.addr %s571, 8
        %s573 = scalar_lea.vmem [#allocation2], %s572
        // Predicated region
        $region85: #{tpu_custom_call.1} parent=83 // pred_check
          %p574 = pneg %p60
        $region86: #{tpu_custom_call.1} parent=83 // pred_check_branch
          %576 = sbr.rel (%p574) target = $region88
        $region87: #{tpu_custom_call.1} parent=83 // pred_region
          %577 = dma.done %s570, 128
        $region88: #{tpu_custom_call.1} parent=83 // pred_fallthru
          _
        %s578 = sand.u32 %s39, 1
        %s579 = scalar_lea.sflag [#allocation6], %s578
        %s580 = sand.u32 %s73, 1
        %s581 = scalar_lea.vmem [#allocation5], %s580
        // Predicated region
        $region89: #{tpu_custom_call.1} parent=83 // pred_check
          %p582 = pneg %p86
        $region90: #{tpu_custom_call.1} parent=83 // pred_check_branch
          %584 = sbr.rel (%p582) target = $region92
        $region91: #{tpu_custom_call.1} parent=83 // pred_region
          %585 = dma.done %s579, 16
        $region92: #{tpu_custom_call.1} parent=83 // pred_fallthru
          _
        // Predicated region
        $region93: #{tpu_custom_call.1} parent=83 // pred_check
          %p586 = pneg %p107
        $region94: #{tpu_custom_call.1} parent=83 // pred_check_branch
          %588 = sbr.rel (%p586) target = $region96
        $region95: #{tpu_custom_call.1} parent=83 // pred_region
          %589 = dma.done [#allocation6], 16
        $region96: #{tpu_custom_call.1} parent=83 // pred_fallthru
          _
        // Predicated region
        $region97: #{tpu_custom_call.1} parent=83 // pred_check
          %p590 = pneg %p128
        $region98: #{tpu_custom_call.1} parent=83 // pred_check_branch
          %592 = sbr.rel (%p590) target = $region100
        $region99: #{tpu_custom_call.1} parent=83 // pred_region
          %593 = dma.done [#allocation9], 16
        $region100: #{tpu_custom_call.1} parent=83 // pred_fallthru
          _
        // Predicated region
        $region101: #{tpu_custom_call.1} parent=83 // pred_check
          %p594 = pneg %p191
        $region102: #{tpu_custom_call.1} parent=83 // pred_check_branch
          %596 = sbr.rel (%p594) target = $region104
        $region103: #{tpu_custom_call.1} parent=83 // pred_region
          %597 = dma.done [#allocation9], 512
        $region104: #{tpu_custom_call.1} parent=83 // pred_fallthru
          _
        // Predicated region
        $region105: #{tpu_custom_call.1} parent=83 // pred_check
          %p598 = pneg %p212
        $region106: #{tpu_custom_call.1} parent=83 // pred_check_branch
          %600 = sbr.rel (%p598) target = $region108
        $region107: #{tpu_custom_call.1} parent=83 // pred_region
          %601 = dma.done [#allocation12], 32
        $region108: #{tpu_custom_call.1} parent=83 // pred_fallthru
          _
        // Predicated region
        $region109: #{tpu_custom_call.1} parent=83 // pred_check
          %p602 = pneg %p233
        $region110: #{tpu_custom_call.1} parent=83 // pred_check_branch
          %604 = sbr.rel (%p602) target = $region112
        $region111: #{tpu_custom_call.1} parent=83 // pred_region
          %605 = dma.done [#allocation12], 512
        $region112: #{tpu_custom_call.1} parent=83 // pred_fallthru
          _
        // Predicated region
        $region113: #{tpu_custom_call.1} parent=83 // pred_check
          %p606 = pneg %p254
        $region114: #{tpu_custom_call.1} parent=83 // pred_check_branch
          %608 = sbr.rel (%p606) target = $region116
        $region115: #{tpu_custom_call.1} parent=83 // pred_region
          %609 = dma.done [#allocation15], 32
        $region116: #{tpu_custom_call.1} parent=83 // pred_fallthru
          _
        // Predicated region
        $region117: #{tpu_custom_call.1} parent=83 // pred_check
          %p610 = pneg %p317
        $region118: #{tpu_custom_call.1} parent=83 // pred_check_branch
          %612 = sbr.rel (%p610) target = $region120
        $region119: #{tpu_custom_call.1} parent=83 // pred_region
          %613 = dma.done [#allocation15], 32
        $region120: #{tpu_custom_call.1} parent=83 // pred_fallthru
          _
        %s614 = sand.u32 %s47, 1
        %s615 = scalar_lea.sflag [#allocation3], %s614
        %s616 = sand.u32 %s47, 1
        %s617 = smul.addr %s616, 8
        %s618 = scalar_lea.vmem [#allocation2], %s617
        %p619 = pneg %p60
        %p620 = pneg %p57
        %s621 = sand.u32 %s39, 1
        %s622 = scalar_lea.sflag [#allocation6], %s621
        %s623 = sand.u32 %s73, 1
        %s624 = scalar_lea.vmem [#allocation5], %s623
        %p625 = pneg %p86
        %p626 = pneg %p83
        %p627 = pneg %p107
        %p628 = pneg %p104
        %p629 = pneg %p128
        %p630 = pneg %p125
        %p631 = pneg %p149
        %p632 = pneg %p146
        %p633 = pneg %p170
        %p634 = pneg %p167
        %p635 = pneg %p191
        %p636 = pneg %p188
        %p637 = pneg %p212
        %p638 = pneg %p209
        %p639 = pneg %p233
        %p640 = pneg %p230
        %p641 = pneg %p254
        %p642 = pneg %p251
        %p643 = pneg %p275
        %p644 = pneg %p272
        %p645 = pneg %p296
        %p646 = pneg %p293
        %p647 = pneg %p317
        %p648 = pneg %p314
        %p649 = pneg %p338
        %p650 = pneg %p335
        %p651 = pneg %p359
        %p652 = pneg %p356
        %p653 = pneg %p380
        %p654 = pneg %p377
        %p655 = pneg %p406
        %p656 = pneg %p403
        %s657 = sand.u32 %s393, 1
        %s658 = scalar_lea.sflag [#allocation4], %s657
        %s659 = sand.u32 %s393, 1
        %s660 = smul.addr %s659, 8
        %s661 = scalar_lea.vmem [#allocation17], %s660
        %v663 = vld [vmem:[%s573] sm:$0xff]
        %v664 = vld [vmem:[%s581] sm:$0x1]
        %v665 = vlaneseq
        %v666 = vand.u32 %v665, 127
        %v667 = vld [vmem:[#allocation7] sm:$0x1]
        %v668 = vld [vmem:[#allocation8] sm:$0x1]
        %vm669 = vcmask 261120
        %v670 = vsel %vm669, %v663, 0.0
        %671 = vadd.xlane.f32.xlu0 %v670
        %v672 = vpop.xlane.xlu0 %671
        %v673 = vrcp.pop 32.0
        %v674 = vmul.f32 %v672, %v673
        %v675 = vsub.f32 %v663, %v674
        %v676 = vmul.f32 %v675, %v675
        %v677 = vsel %vm669, %v676, 0.0
        %678 = vadd.xlane.f32.xlu0 %v677
        %v679 = vpop.xlane.xlu0 %678
        %v680 = vmul.f32 %v679, %v673
        %v681 = vadd.f32 %v680, 1e-12
        %v682 = vrsqrt.pop %v681
        %v683 = vmul.f32 %v675, %v682
        %v685 = vlaneseq
        %v686 = vshrl.u32 %v685, 7
        %v687 = vsub.s32 0, %v686
        %v688 = vrot.slane %v667, %v687
        %v690 = vmul.f32 %v683, %v688
        %v692 = vlaneseq
        %v693 = vshrl.u32 %v692, 7
        %v694 = vsub.s32 0, %v693
        %v695 = vrot.slane %v668, %v694
        %v697 = vadd.f32 %v690, %v695
        %v698 = vpack.c.bf16 %v697, %v697
        %v699 = vld [vmem:[%s4] sm:$0xf]
        %v700 = vld [vmem:[%s4 + $0x4] sm:$0xf]
        %v701 = vld [vmem:[%s4 + $0x8] sm:$0xf]
        %v702 = vld [vmem:[%s4 + $0xc] sm:$0xf]
        %v703 = vld [vmem:[%s5] sm:$0x1]
        %v704 = vlaneseq
        %v705 = vshrl.u32 %v704, 7
        %v706 = vsub.s32 0, %v705
        %v707 = vrot.slane %v703, %v706
        %v712 = vunpack.c.l.b16 %v699
        %v713 = vunpack.c.l.b16 %v700
        %v714 = vunpack.c.l.b16 %v701
        %v715 = vunpack.c.l.b16 %v702
        %v716 = vpack.c.b16 %v713, %v712
        %v717 = vpack.c.b16 %v715, %v714
        %v721 = vsel %vm669, %v698, 0
        %723 = vmatprep.subr.bf16.mxu0 0
        %724 = vmatpush1.bf16.msra.mxu0 0
        %725 = vmatprep.subr.bf16.mxu0 0
        %726 = vmatpush1.bf16.msra.mxu0 0
        %727 = vmatprep.subr.bf16.mxu0 0
        %728 = vmatpush1.bf16.msra.mxu0 0
        %729 = vmatprep.subr.bf16.mxu0 0
        %730 = vmatpush1.bf16.msra.mxu0 0
        %731 = vmatprep.subr.bf16.mxu0 0
        %732 = vmatpush1.bf16.msra.mxu0 0
        %733 = vmatprep.subr.bf16.mxu0 0
        %734 = vmatpush1.bf16.msra.mxu0 0
        %735 = vmatprep.subr.bf16.mxu0 0
        %736 = vmatpush1.bf16.msra.mxu0 %v717
        %737 = vmatprep.subr.bf16.mxu0 0
        %738 = vmatpush1.bf16.msra.mxu0 %v716
        %739 = vmatprep.subr.bf16.mxu0 0
        %740 = vmatpush2.bf16.msra.mxu0 0
        %741 = vmatprep.subr.bf16.mxu0 0
        %742 = vmatpush2.bf16.msra.mxu0 0
        %743 = vmatprep.subr.bf16.mxu0 0
        %744 = vmatpush2.bf16.msra.mxu0 0
        %745 = vmatprep.subr.bf16.mxu0 0
        %746 = vmatpush2.bf16.msra.mxu0 0
        %747 = vmatprep.subr.bf16.mxu0 0
        %748 = vmatpush2.bf16.msra.mxu0 0
        %749 = vmatprep.subr.bf16.mxu0 0
        %750 = vmatpush2.bf16.msra.mxu0 0
        %751 = vmatprep.subr.bf16.mxu0 0
        %752 = vmatpush2.bf16.msra.mxu0 0
        %753 = vmatprep.subr.bf16.mxu0 0
        %754 = vmatpush2.bf16.msra.mxu0 0
        %755 = vmatprep.mubr.bf16.mxu0 0
        %756 = vmatmul.mubr.bf16.gmra.mxu0 %v721
        %v757 = vpop.f32.mrf.mxu0
        %v758 = vadd.f32 %v707, %v757
        %v759 = vpop.f32.mrf.mxu0
        %v760 = vpop.f32.mrf.mxu0
        %v761 = vpop.f32.mrf.mxu0
        %762 = vdwg.mxu0
        %s763 = scalar_lea.vmem %s4, 16
        %v764 = vld [vmem:[%s763] sm:$0xf]
        %v765 = vld [vmem:[%s763 + $0x4] sm:$0xf]
        %v766 = vld [vmem:[%s763 + $0x8] sm:$0xf]
        %v767 = vld [vmem:[%s763 + $0xc] sm:$0xf]
        %v768 = vld [vmem:[%s5 + $0x1] sm:$0x1]
        %v769 = vlaneseq
        %v770 = vshrl.u32 %v769, 7
        %v771 = vsub.s32 0, %v770
        %v772 = vrot.slane %v768, %v771
        %v777 = vunpack.c.l.b16 %v764
        %v778 = vunpack.c.l.b16 %v765
        %v779 = vunpack.c.l.b16 %v766
        %v780 = vunpack.c.l.b16 %v767
        %v781 = vpack.c.b16 %v778, %v777
        %v782 = vpack.c.b16 %v780, %v779
        %785 = vmatprep.subr.bf16.mxu0 0
        %786 = vmatpush1.bf16.msra.mxu0 0
        %787 = vmatprep.subr.bf16.mxu0 0
        %788 = vmatpush1.bf16.msra.mxu0 0
        %789 = vmatprep.subr.bf16.mxu0 0
        %790 = vmatpush1.bf16.msra.mxu0 0
        %791 = vmatprep.subr.bf16.mxu0 0
        %792 = vmatpush1.bf16.msra.mxu0 0
        %793 = vmatprep.subr.bf16.mxu0 0
        %794 = vmatpush1.bf16.msra.mxu0 0
        %795 = vmatprep.subr.bf16.mxu0 0
        %796 = vmatpush1.bf16.msra.mxu0 0
        %797 = vmatprep.subr.bf16.mxu0 0
        %798 = vmatpush1.bf16.msra.mxu0 %v782
        %799 = vmatprep.subr.bf16.mxu0 0
        %800 = vmatpush1.bf16.msra.mxu0 %v781
        %801 = vmatprep.subr.bf16.mxu0 0
        %802 = vmatpush2.bf16.msra.mxu0 0
        %803 = vmatprep.subr.bf16.mxu0 0
        %804 = vmatpush2.bf16.msra.mxu0 0
        %805 = vmatprep.subr.bf16.mxu0 0
        %806 = vmatpush2.bf16.msra.mxu0 0
        %807 = vmatprep.subr.bf16.mxu0 0
        %808 = vmatpush2.bf16.msra.mxu0 0
        %809 = vmatprep.subr.bf16.mxu0 0
        %810 = vmatpush2.bf16.msra.mxu0 0
        %811 = vmatprep.subr.bf16.mxu0 0
        %812 = vmatpush2.bf16.msra.mxu0 0
        %813 = vmatprep.subr.bf16.mxu0 0
        %814 = vmatpush2.bf16.msra.mxu0 0
        %815 = vmatprep.subr.bf16.mxu0 0
        %816 = vmatpush2.bf16.msra.mxu0 0
        %817 = vmatprep.mubr.bf16.mxu0 0
        %818 = vmatmul.mubr.bf16.gmra.mxu0 %v721
        %v819 = vpop.f32.mrf.mxu0
        %v820 = vadd.f32 %v772, %v819
        %v821 = vpop.f32.mrf.mxu0
        %v822 = vpop.f32.mrf.mxu0
        %v823 = vpop.f32.mrf.mxu0
        %824 = vdwg.mxu0
        %s825 = scalar_lea.vmem %s4, 32
        %v826 = vld [vmem:[%s825] sm:$0xf]
        %v827 = vld [vmem:[%s825 + $0x4] sm:$0xf]
        %v828 = vld [vmem:[%s825 + $0x8] sm:$0xf]
        %v829 = vld [vmem:[%s825 + $0xc] sm:$0xf]
        %v830 = vld [vmem:[%s5 + $0x2] sm:$0x1]
        %v831 = vlaneseq
        %v832 = vshrl.u32 %v831, 7
        %v833 = vsub.s32 0, %v832
        %v834 = vrot.slane %v830, %v833
        %v839 = vunpack.c.l.b16 %v826
        %v840 = vunpack.c.l.b16 %v827
        %v841 = vunpack.c.l.b16 %v828
        %v842 = vunpack.c.l.b16 %v829
        %v843 = vpack.c.b16 %v840, %v839
        %v844 = vpack.c.b16 %v842, %v841
        %847 = vmatprep.subr.bf16.mxu0 0
        %848 = vmatpush1.bf16.msra.mxu0 0
        %849 = vmatprep.subr.bf16.mxu0 0
        %850 = vmatpush1.bf16.msra.mxu0 0
        %851 = vmatprep.subr.bf16.mxu0 0
        %852 = vmatpush1.bf16.msra.mxu0 0
        %853 = vmatprep.subr.bf16.mxu0 0
        %854 = vmatpush1.bf16.msra.mxu0 0
        %855 = vmatprep.subr.bf16.mxu0 0
        %856 = vmatpush1.bf16.msra.mxu0 0
        %857 = vmatprep.subr.bf16.mxu0 0
        %858 = vmatpush1.bf16.msra.mxu0 0
        %859 = vmatprep.subr.bf16.mxu0 0
        %860 = vmatpush1.bf16.msra.mxu0 %v844
        %861 = vmatprep.subr.bf16.mxu0 0
        %862 = vmatpush1.bf16.msra.mxu0 %v843
        %863 = vmatprep.subr.bf16.mxu0 0
        %864 = vmatpush2.bf16.msra.mxu0 0
        %865 = vmatprep.subr.bf16.mxu0 0
        %866 = vmatpush2.bf16.msra.mxu0 0
        %867 = vmatprep.subr.bf16.mxu0 0
        %868 = vmatpush2.bf16.msra.mxu0 0
        %869 = vmatprep.subr.bf16.mxu0 0
        %870 = vmatpush2.bf16.msra.mxu0 0
        %871 = vmatprep.subr.bf16.mxu0 0
        %872 = vmatpush2.bf16.msra.mxu0 0
        %873 = vmatprep.subr.bf16.mxu0 0
        %874 = vmatpush2.bf16.msra.mxu0 0
        %875 = vmatprep.subr.bf16.mxu0 0
        %876 = vmatpush2.bf16.msra.mxu0 0
        %877 = vmatprep.subr.bf16.mxu0 0
        %878 = vmatpush2.bf16.msra.mxu0 0
        %879 = vmatprep.mubr.bf16.mxu0 0
        %880 = vmatmul.mubr.bf16.gmra.mxu0 %v721
        %v881 = vpop.f32.mrf.mxu0
        %v882 = vadd.f32 %v834, %v881
        %v883 = vpop.f32.mrf.mxu0
        %v884 = vpop.f32.mrf.mxu0
        %v885 = vpop.f32.mrf.mxu0
        %886 = vdwg.mxu0
        %v887 = vpack.c.bf16 %v820, %v820
        %vm888 = vcmp.ge.s32.totalorder %v666, 0
        %vm889 = vcmp.lt.s32.totalorder %v666, 16
        %vm890 = vmand %vm888, %vm889
        %v891 = vsel %vm890, 1, 0
        %v892 = vcvt.s32.f32 %v891
        %v893 = vmul.f32 %v758, %v892
        %v894 = vpack.c.bf16 %v893, %v893
        %v896 = vsel %vm669, %v894, 0
        %v899 = vsel %vm669, %v887, 0
        %901 = vmatprep.subr.bf16.mxu0 0
        %902 = vmatpush1.bf16.xpose.msra.mxu0 0
        %903 = vmatprep.subr.bf16.mxu0 0
        %904 = vmatpush1.bf16.xpose.msra.mxu0 0
        %905 = vmatprep.subr.bf16.mxu0 0
        %906 = vmatpush1.bf16.xpose.msra.mxu0 0
        %907 = vmatprep.subr.bf16.mxu0 0
        %908 = vmatpush1.bf16.xpose.msra.mxu0 0
        %909 = vmatprep.subr.bf16.mxu0 0
        %910 = vmatpush1.bf16.xpose.msra.mxu0 0
        %911 = vmatprep.subr.bf16.mxu0 0
        %912 = vmatpush1.bf16.xpose.msra.mxu0 0
        %913 = vmatprep.subr.bf16.mxu0 0
        %914 = vmatpush1.bf16.xpose.msra.mxu0 0
        %915 = vmatprep.subr.bf16.mxu0 0
        %916 = vmatpush1.bf16.xpose.msra.mxu0 %v899
        %917 = vmatprep.subr.bf16.mxu0 0
        %918 = vmatpush2.bf16.xpose.msra.mxu0 0
        %919 = vmatprep.subr.bf16.mxu0 0
        %920 = vmatpush2.bf16.xpose.msra.mxu0 0
        %921 = vmatprep.subr.bf16.mxu0 0
        %922 = vmatpush2.bf16.xpose.msra.mxu0 0
        %923 = vmatprep.subr.bf16.mxu0 0
        %924 = vmatpush2.bf16.xpose.msra.mxu0 0
        %925 = vmatprep.subr.bf16.mxu0 0
        %926 = vmatpush2.bf16.xpose.msra.mxu0 0
        %927 = vmatprep.subr.bf16.mxu0 0
        %928 = vmatpush2.bf16.xpose.msra.mxu0 0
        %929 = vmatprep.subr.bf16.mxu0 0
        %930 = vmatpush2.bf16.xpose.msra.mxu0 0
        %931 = vmatprep.subr.bf16.mxu0 0
        %932 = vmatpush2.bf16.xpose.msra.mxu0 0
        %933 = vmatprep.mubr.bf16.mxu0 0
        %934 = vmatmul.mubr.bf16.gmra.mxu0 %v896
        %v935 = vpop.f32.mrf.mxu0
        %v936 = vadd.f32 0.0, %v935
        %v937 = vpop.f32.mrf.mxu0
        %v938 = vpop.f32.mrf.mxu0
        %v939 = vpop.f32.mrf.mxu0
        %940 = vdwg.mxu0
        %v941 = vmul.f32 %v936, 0.25
        %v943 = vlaneseq
        %v944 = vshrl.u32 %v943, 7
        %v945 = vsub.s32 0, %v944
        %v946 = vrot.slane %v664, %v945
        %v948 = vadd.f32 %v941, %v946
        %vm949 = vcmask 64512
        %v950 = vsel %vm949, %v948, -inf
        %951 = vmax.xlane.f32.xlu0 %v950
        %v952 = vpop.xlane.xlu0 %951
        %v953 = vsub.f32 %v948, %v952
        %v954 = vmul.f32 %v953, 1.442695
        %v955 = vpow.pop %v954
        %v956 = vsel %vm949, %v955, 0.0
        %957 = vadd.xlane.f32.xlu0 %v956
        %v958 = vpop.xlane.xlu0 %957
        %v959 = vrcp.pop %v958
        %v960 = vmul.f32 %v955, %v959
        %v961 = vmul.f32 %v882, %v892
        %v962 = vpack.c.bf16 %v961, %v961
        %v963 = vpack.c.bf16 %v960, %v960
        %vm964 = vcmp.ge.s32.totalorder %v666, 16
        %vm965 = vcmp.lt.s32.totalorder %v666, 32
        %vm966 = vmand %vm964, %vm965
        %v967 = vsel %vm966, 1, 0
        %v968 = vcvt.s32.f32 %v967
        %v969 = vmul.f32 %v758, %v968
        %v970 = vpack.c.bf16 %v969, %v969
        %v972 = vsel %vm669, %v970, 0
        %974 = vmatprep.subr.bf16.mxu0 0
        %975 = vmatpush1.bf16.xpose.msra.mxu0 0
        %976 = vmatprep.subr.bf16.mxu0 0
        %977 = vmatpush1.bf16.xpose.msra.mxu0 0
        %978 = vmatprep.subr.bf16.mxu0 0
        %979 = vmatpush1.bf16.xpose.msra.mxu0 0
        %980 = vmatprep.subr.bf16.mxu0 0
        %981 = vmatpush1.bf16.xpose.msra.mxu0 0
        %982 = vmatprep.subr.bf16.mxu0 0
        %983 = vmatpush1.bf16.xpose.msra.mxu0 0
        %984 = vmatprep.subr.bf16.mxu0 0
        %985 = vmatpush1.bf16.xpose.msra.mxu0 0
        %986 = vmatprep.subr.bf16.mxu0 0
        %987 = vmatpush1.bf16.xpose.msra.mxu0 0
        %988 = vmatprep.subr.bf16.mxu0 0
        %989 = vmatpush1.bf16.xpose.msra.mxu0 %v899
        %990 = vmatprep.subr.bf16.mxu0 0
        %991 = vmatpush2.bf16.xpose.msra.mxu0 0
        %992 = vmatprep.subr.bf16.mxu0 0
        %993 = vmatpush2.bf16.xpose.msra.mxu0 0
        %994 = vmatprep.subr.bf16.mxu0 0
        %995 = vmatpush2.bf16.xpose.msra.mxu0 0
        %996 = vmatprep.subr.bf16.mxu0 0
        %997 = vmatpush2.bf16.xpose.msra.mxu0 0
        %998 = vmatprep.subr.bf16.mxu0 0
        %999 = vmatpush2.bf16.xpose.msra.mxu0 0
        %1000 = vmatprep.subr.bf16.mxu0 0
        %1001 = vmatpush2.bf16.xpose.msra.mxu0 0
        %1002 = vmatprep.subr.bf16.mxu0 0
        %1003 = vmatpush2.bf16.xpose.msra.mxu0 0
        %1004 = vmatprep.subr.bf16.mxu0 0
        %1005 = vmatpush2.bf16.xpose.msra.mxu0 0
        %1006 = vmatprep.mubr.bf16.mxu0 0
        %1007 = vmatmul.mubr.bf16.gmra.mxu0 %v972
        %v1008 = vpop.f32.mrf.mxu0
        %v1009 = vadd.f32 0.0, %v1008
        %v1010 = vpop.f32.mrf.mxu0
        %v1011 = vpop.f32.mrf.mxu0
        %v1012 = vpop.f32.mrf.mxu0
        %1013 = vdwg.mxu0
        %v1014 = vmul.f32 %v1009, 0.25
        %v1015 = vadd.f32 %v1014, %v946
        %v1016 = vsel %vm949, %v1015, -inf
        %1017 = vmax.xlane.f32.xlu0 %v1016
        %v1018 = vpop.xlane.xlu0 %1017
        %v1019 = vsub.f32 %v1015, %v1018
        %v1020 = vmul.f32 %v1019, 1.442695
        %v1021 = vpow.pop %v1020
        %v1022 = vsel %vm949, %v1021, 0.0
        %1023 = vadd.xlane.f32.xlu0 %v1022
        %v1024 = vpop.xlane.xlu0 %1023
        %v1025 = vrcp.pop %v1024
        %v1026 = vmul.f32 %v1021, %v1025
        %v1027 = vmul.f32 %v882, %v968
        %v1028 = vpack.c.bf16 %v1027, %v1027
        %v1029 = vpack.c.bf16 %v1026, %v1026
        %v1031 = vsel %vm949, %v1029, 0
        %vm1033 = vcmask 1043456
        %v1035 = vsel %vm1033, %v1028, 0
        %1037 = vmatprep.subr.bf16.mxu0 0
        %1038 = vmatpush1.bf16.msra.mxu0 0
        %1039 = vmatprep.subr.bf16.mxu0 0
        %1040 = vmatpush1.bf16.msra.mxu0 0
        %1041 = vmatprep.subr.bf16.mxu0 0
        %1042 = vmatpush1.bf16.msra.mxu0 0
        %1043 = vmatprep.subr.bf16.mxu0 0
        %1044 = vmatpush1.bf16.msra.mxu0 0
        %1045 = vmatprep.subr.bf16.mxu0 0
        %1046 = vmatpush1.bf16.msra.mxu0 0
        %1047 = vmatprep.subr.bf16.mxu0 0
        %1048 = vmatpush1.bf16.msra.mxu0 0
        %1049 = vmatprep.subr.bf16.mxu0 0
        %1050 = vmatpush1.bf16.msra.mxu0 0
        %1051 = vmatprep.subr.bf16.mxu0 0
        %1052 = vmatpush1.bf16.msra.mxu0 %v1035
        %1053 = vmatprep.subr.bf16.mxu0 0
        %1054 = vmatpush2.bf16.msra.mxu0 0
        %1055 = vmatprep.subr.bf16.mxu0 0
        %1056 = vmatpush2.bf16.msra.mxu0 0
        %1057 = vmatprep.subr.bf16.mxu0 0
        %1058 = vmatpush2.bf16.msra.mxu0 0
        %1059 = vmatprep.subr.bf16.mxu0 0
        %1060 = vmatpush2.bf16.msra.mxu0 0
        %1061 = vmatprep.subr.bf16.mxu0 0
        %1062 = vmatpush2.bf16.msra.mxu0 0
        %1063 = vmatprep.subr.bf16.mxu0 0
        %1064 = vmatpush2.bf16.msra.mxu0 0
        %1065 = vmatprep.subr.bf16.mxu0 0
        %1066 = vmatpush2.bf16.msra.mxu0 0
        %1067 = vmatprep.subr.bf16.mxu0 0
        %1068 = vmatpush2.bf16.msra.mxu0 0
        %1069 = vmatprep.mubr.bf16.mxu0 0
        %1070 = vmatmul.mubr.bf16.gmra.mxu0 %v1031
        %v1071 = vpop.f32.mrf.mxu0
        %v1072 = vadd.f32 0.0, %v1071
        %v1073 = vpop.f32.mrf.mxu0
        %v1074 = vpop.f32.mrf.mxu0
        %v1075 = vpop.f32.mrf.mxu0
        %1076 = vdwg.mxu0
        %v1078 = vsel %vm949, %v963, 0
        %v1081 = vsel %vm1033, %v962, 0
        %1083 = vmatprep.subr.bf16.mxu0 0
        %1084 = vmatpush1.bf16.msra.mxu0 0
        %1085 = vmatprep.subr.bf16.mxu0 0
        %1086 = vmatpush1.bf16.msra.mxu0 0
        %1087 = vmatprep.subr.bf16.mxu0 0
        %1088 = vmatpush1.bf16.msra.mxu0 0
        %1089 = vmatprep.subr.bf16.mxu0 0
        %1090 = vmatpush1.bf16.msra.mxu0 0
        %1091 = vmatprep.subr.bf16.mxu0 0
        %1092 = vmatpush1.bf16.msra.mxu0 0
        %1093 = vmatprep.subr.bf16.mxu0 0
        %1094 = vmatpush1.bf16.msra.mxu0 0
        %1095 = vmatprep.subr.bf16.mxu0 0
        %1096 = vmatpush1.bf16.msra.mxu0 0
        %1097 = vmatprep.subr.bf16.mxu0 0
        %1098 = vmatpush1.bf16.msra.mxu0 %v1081
        %1099 = vmatprep.subr.bf16.mxu0 0
        %1100 = vmatpush2.bf16.msra.mxu0 0
        %1101 = vmatprep.subr.bf16.mxu0 0
        %1102 = vmatpush2.bf16.msra.mxu0 0
        %1103 = vmatprep.subr.bf16.mxu0 0
        %1104 = vmatpush2.bf16.msra.mxu0 0
        %1105 = vmatprep.subr.bf16.mxu0 0
        %1106 = vmatpush2.bf16.msra.mxu0 0
        %1107 = vmatprep.subr.bf16.mxu0 0
        %1108 = vmatpush2.bf16.msra.mxu0 0
        %1109 = vmatprep.subr.bf16.mxu0 0
        %1110 = vmatpush2.bf16.msra.mxu0 0
        %1111 = vmatprep.subr.bf16.mxu0 0
        %1112 = vmatpush2.bf16.msra.mxu0 0
        %1113 = vmatprep.subr.bf16.mxu0 0
        %1114 = vmatpush2.bf16.msra.mxu0 0
        %1115 = vmatprep.mubr.bf16.mxu0 0
        %1116 = vmatmul.mubr.bf16.gmra.mxu0 %v1078
        %v1117 = vpop.f32.mrf.mxu0
        %v1118 = vadd.f32 %v1072, %v1117
        %v1119 = vpop.f32.mrf.mxu0
        %v1120 = vpop.f32.mrf.mxu0
        %v1121 = vpop.f32.mrf.mxu0
        %1122 = vdwg.mxu0
        %v1123 = vpack.c.bf16 %v1118, %v1118
        %v1124 = vld [vmem:[#allocation10] sm:$0xf]
        %v1125 = vld [vmem:[#allocation10 + $0x4] sm:$0xf]
        %v1126 = vld [vmem:[#allocation10 + $0x8] sm:$0xf]
        %v1127 = vld [vmem:[#allocation10 + $0xc] sm:$0xf]
        %v1128 = vld [vmem:[#allocation11] sm:$0x1]
        %v1129 = vlaneseq
        %v1130 = vshrl.u32 %v1129, 7
        %v1131 = vsub.s32 0, %v1130
        %v1132 = vrot.slane %v1128, %v1131
        %v1137 = vunpack.c.l.b16 %v1124
        %v1138 = vunpack.c.l.b16 %v1125
        %v1139 = vunpack.c.l.b16 %v1126
        %v1140 = vunpack.c.l.b16 %v1127
        %v1141 = vpack.c.b16 %v1138, %v1137
        %v1142 = vpack.c.b16 %v1140, %v1139
        %v1146 = vsel %vm669, %v1123, 0
        %1148 = vmatprep.subr.bf16.mxu0 0
        %1149 = vmatpush1.bf16.msra.mxu0 0
        %1150 = vmatprep.subr.bf16.mxu0 0
        %1151 = vmatpush1.bf16.msra.mxu0 0
        %1152 = vmatprep.subr.bf16.mxu0 0
        %1153 = vmatpush1.bf16.msra.mxu0 0
        %1154 = vmatprep.subr.bf16.mxu0 0
        %1155 = vmatpush1.bf16.msra.mxu0 0
        %1156 = vmatprep.subr.bf16.mxu0 0
        %1157 = vmatpush1.bf16.msra.mxu0 0
        %1158 = vmatprep.subr.bf16.mxu0 0
        %1159 = vmatpush1.bf16.msra.mxu0 0
        %1160 = vmatprep.subr.bf16.mxu0 0
        %1161 = vmatpush1.bf16.msra.mxu0 %v1142
        %1162 = vmatprep.subr.bf16.mxu0 0
        %1163 = vmatpush1.bf16.msra.mxu0 %v1141
        %1164 = vmatprep.subr.bf16.mxu0 0
        %1165 = vmatpush2.bf16.msra.mxu0 0
        %1166 = vmatprep.subr.bf16.mxu0 0
        %1167 = vmatpush2.bf16.msra.mxu0 0
        %1168 = vmatprep.subr.bf16.mxu0 0
        %1169 = vmatpush2.bf16.msra.mxu0 0
        %1170 = vmatprep.subr.bf16.mxu0 0
        %1171 = vmatpush2.bf16.msra.mxu0 0
        %1172 = vmatprep.subr.bf16.mxu0 0
        %1173 = vmatpush2.bf16.msra.mxu0 0
        %1174 = vmatprep.subr.bf16.mxu0 0
        %1175 = vmatpush2.bf16.msra.mxu0 0
        %1176 = vmatprep.subr.bf16.mxu0 0
        %1177 = vmatpush2.bf16.msra.mxu0 0
        %1178 = vmatprep.subr.bf16.mxu0 0
        %1179 = vmatpush2.bf16.msra.mxu0 0
        %1180 = vmatprep.mubr.bf16.mxu0 0
        %1181 = vmatmul.mubr.bf16.gmra.mxu0 %v1146
        %v1182 = vpop.f32.mrf.mxu0
        %v1183 = vadd.f32 %v1132, %v1182
        %v1184 = vpop.f32.mrf.mxu0
        %v1185 = vpop.f32.mrf.mxu0
        %v1186 = vpop.f32.mrf.mxu0
        %1187 = vdwg.mxu0
        %v1188 = vadd.f32 %v697, %v1183
        %v1189 = vld [vmem:[#allocation16] sm:$0x1]
        %v1190 = vld [vmem:[%s13] sm:$0x1]
        %v1191 = vsel %vm669, %v1188, 0.0
        %1192 = vadd.xlane.f32.xlu0 %v1191
        %v1193 = vpop.xlane.xlu0 %1192
        %v1194 = vmul.f32 %v1193, %v673
        %v1195 = vsub.f32 %v1188, %v1194
        %v1196 = vmul.f32 %v1195, %v1195
        %v1197 = vsel %vm669, %v1196, 0.0
        %1198 = vadd.xlane.f32.xlu0 %v1197
        %v1199 = vpop.xlane.xlu0 %1198
        %v1200 = vmul.f32 %v1199, %v673
        %v1201 = vadd.f32 %v1200, 1e-12
        %v1202 = vrsqrt.pop %v1201
        %v1203 = vmul.f32 %v1195, %v1202
        %v1204 = vlaneseq
        %v1205 = vshrl.u32 %v1204, 7
        %v1206 = vsub.s32 0, %v1205
        %v1207 = vrot.slane %v1189, %v1206
        %v1208 = vmul.f32 %v1203, %v1207
        %v1209 = vlaneseq
        %v1210 = vshrl.u32 %v1209, 7
        %v1211 = vsub.s32 0, %v1210
        %v1212 = vrot.slane %v1190, %v1211
        %v1213 = vadd.f32 %v1208, %v1212
        %v1214 = vpack.c.bf16 %v1213, %v1213
        %v1215 = vld [vmem:[#allocation13] sm:$0xf]
        %v1216 = vld [vmem:[#allocation13 + $0x4] sm:$0xf]
        %v1217 = vld [vmem:[#allocation13 + $0x8] sm:$0xf]
        %v1218 = vld [vmem:[#allocation13 + $0xc] sm:$0xf]
        %v1219 = vld [vmem:[#allocation14] sm:$0x1]
        %v1220 = vlaneseq
        %v1221 = vshrl.u32 %v1220, 7
        %v1222 = vsub.s32 0, %v1221
        %v1223 = vrot.slane %v1219, %v1222
        %v1228 = vunpack.c.l.b16 %v1215
        %v1229 = vunpack.c.l.b16 %v1216
        %v1230 = vunpack.c.l.b16 %v1217
        %v1231 = vunpack.c.l.b16 %v1218
        %v1232 = vpack.c.b16 %v1229, %v1228
        %v1233 = vpack.c.b16 %v1231, %v1230
        %v1237 = vsel %vm669, %v1214, 0
        %1239 = vmatprep.subr.bf16.mxu0 0
        %1240 = vmatpush1.bf16.msra.mxu0 0
        %1241 = vmatprep.subr.bf16.mxu0 0
        %1242 = vmatpush1.bf16.msra.mxu0 0
        %1243 = vmatprep.subr.bf16.mxu0 0
        %1244 = vmatpush1.bf16.msra.mxu0 0
        %1245 = vmatprep.subr.bf16.mxu0 0
        %1246 = vmatpush1.bf16.msra.mxu0 0
        %1247 = vmatprep.subr.bf16.mxu0 0
        %1248 = vmatpush1.bf16.msra.mxu0 0
        %1249 = vmatprep.subr.bf16.mxu0 0
        %1250 = vmatpush1.bf16.msra.mxu0 0
        %1251 = vmatprep.subr.bf16.mxu0 0
        %1252 = vmatpush1.bf16.msra.mxu0 %v1233
        %1253 = vmatprep.subr.bf16.mxu0 0
        %1254 = vmatpush1.bf16.msra.mxu0 %v1232
        %1255 = vmatprep.subr.bf16.mxu0 0
        %1256 = vmatpush2.bf16.msra.mxu0 0
        %1257 = vmatprep.subr.bf16.mxu0 0
        %1258 = vmatpush2.bf16.msra.mxu0 0
        %1259 = vmatprep.subr.bf16.mxu0 0
        %1260 = vmatpush2.bf16.msra.mxu0 0
        %1261 = vmatprep.subr.bf16.mxu0 0
        %1262 = vmatpush2.bf16.msra.mxu0 0
        %1263 = vmatprep.subr.bf16.mxu0 0
        %1264 = vmatpush2.bf16.msra.mxu0 0
        %1265 = vmatprep.subr.bf16.mxu0 0
        %1266 = vmatpush2.bf16.msra.mxu0 0
        %1267 = vmatprep.subr.bf16.mxu0 0
        %1268 = vmatpush2.bf16.msra.mxu0 0
        %1269 = vmatprep.subr.bf16.mxu0 0
        %1270 = vmatpush2.bf16.msra.mxu0 0
        %1271 = vmatprep.mubr.bf16.mxu0 0
        %1272 = vmatmul.mubr.bf16.gmra.mxu0 %v1237
        %v1273 = vpop.f32.mrf.mxu0
        %v1274 = vadd.f32 %v1223, %v1273
        %v1275 = vpop.f32.mrf.mxu0
        %v1276 = vpop.f32.mrf.mxu0
        %v1277 = vpop.f32.mrf.mxu0
        %1278 = vdwg.mxu0
        %v1279 = vmul.f32 %v1274, %v1274
        %v1280 = vmul.f32 %v1274, %v1279
        %v1281 = vmul.f32 %v1280, 0.044715
        %v1282 = vadd.f32 %v1274, %v1281
        %v1283 = vmul.f32 %v1282, 0.7978846
        %v1284 = vtanh.pop %v1283
        %v1285 = vadd.f32 %v1284, 1.0
        %v1286 = vmul.f32 %v1285, 0.5
        %v1287 = vmul.f32 %v1274, %v1286
        %v1288 = vpack.c.bf16 %v1287, %v1287
        %v1289 = vld [vmem:[%s10] sm:$0xf]
        %v1290 = vld [vmem:[%s10 + $0x4] sm:$0xf]
        %v1291 = vld [vmem:[%s10 + $0x8] sm:$0xf]
        %v1292 = vld [vmem:[%s10 + $0xc] sm:$0xf]
        %v1293 = vld [vmem:[%s10 + $0x10] sm:$0xf]
        %v1294 = vld [vmem:[%s10 + $0x14] sm:$0xf]
        %v1295 = vld [vmem:[%s10 + $0x18] sm:$0xf]
        %v1296 = vld [vmem:[%s10 + $0x1c] sm:$0xf]
        %v1297 = vld [vmem:[%s11] sm:$0x1]
        %v1298 = vlaneseq
        %v1299 = vshrl.u32 %v1298, 7
        %v1300 = vsub.s32 0, %v1299
        %v1301 = vrot.slane %v1297, %v1300
        %v1310 = vunpack.c.l.b16 %v1289
        %v1311 = vunpack.c.l.b16 %v1290
        %v1312 = vunpack.c.l.b16 %v1291
        %v1313 = vunpack.c.l.b16 %v1292
        %v1314 = vunpack.c.l.b16 %v1293
        %v1315 = vunpack.c.l.b16 %v1294
        %v1316 = vunpack.c.l.b16 %v1295
        %v1317 = vunpack.c.l.b16 %v1296
        %v1318 = vpack.c.b16 %v1311, %v1310
        %v1319 = vpack.c.b16 %v1313, %v1312
        %v1320 = vpack.c.b16 %v1315, %v1314
        %v1321 = vpack.c.b16 %v1317, %v1316
        %vm1326 = vcmask 523264
        %v1328 = vsel %vm1326, %v1288, 0
        %1330 = vmatprep.subr.bf16.mxu0 0
        %1331 = vmatpush1.bf16.msra.mxu0 0
        %1332 = vmatprep.subr.bf16.mxu0 0
        %1333 = vmatpush1.bf16.msra.mxu0 0
        %1334 = vmatprep.subr.bf16.mxu0 0
        %1335 = vmatpush1.bf16.msra.mxu0 0
        %1336 = vmatprep.subr.bf16.mxu0 0
        %1337 = vmatpush1.bf16.msra.mxu0 0
        %1338 = vmatprep.subr.bf16.mxu0 0
        %1339 = vmatpush1.bf16.msra.mxu0 %v1321
        %1340 = vmatprep.subr.bf16.mxu0 0
        %1341 = vmatpush1.bf16.msra.mxu0 %v1320
        %1342 = vmatprep.subr.bf16.mxu0 0
        %1343 = vmatpush1.bf16.msra.mxu0 %v1319
        %1344 = vmatprep.subr.bf16.mxu0 0
        %1345 = vmatpush1.bf16.msra.mxu0 %v1318
        %1346 = vmatprep.subr.bf16.mxu0 0
        %1347 = vmatpush2.bf16.msra.mxu0 0
        %1348 = vmatprep.subr.bf16.mxu0 0
        %1349 = vmatpush2.bf16.msra.mxu0 0
        %1350 = vmatprep.subr.bf16.mxu0 0
        %1351 = vmatpush2.bf16.msra.mxu0 0
        %1352 = vmatprep.subr.bf16.mxu0 0
        %1353 = vmatpush2.bf16.msra.mxu0 0
        %1354 = vmatprep.subr.bf16.mxu0 0
        %1355 = vmatpush2.bf16.msra.mxu0 0
        %1356 = vmatprep.subr.bf16.mxu0 0
        %1357 = vmatpush2.bf16.msra.mxu0 0
        %1358 = vmatprep.subr.bf16.mxu0 0
        %1359 = vmatpush2.bf16.msra.mxu0 0
        %1360 = vmatprep.subr.bf16.mxu0 0
        %1361 = vmatpush2.bf16.msra.mxu0 0
        %1362 = vmatprep.mubr.bf16.mxu0 0
        %1363 = vmatmul.mubr.bf16.gmra.mxu0 %v1328
        %v1364 = vpop.f32.mrf.mxu0
        %v1365 = vadd.f32 %v1301, %v1364
        %v1366 = vpop.f32.mrf.mxu0
        %v1367 = vpop.f32.mrf.mxu0
        %v1368 = vpop.f32.mrf.mxu0
        %1369 = vdwg.mxu0
        %v1370 = vadd.f32 %v1213, %v1365
        %v1371 = vld [vmem:[%s14] sm:$0x1]
        %v1372 = vld [vmem:[%s15] sm:$0x1]
        %v1373 = vsel %vm669, %v1370, 0.0
        %1374 = vadd.xlane.f32.xlu0 %v1373
        %v1375 = vpop.xlane.xlu0 %1374
        %v1376 = vmul.f32 %v1375, %v673
        %v1377 = vsub.f32 %v1370, %v1376
        %v1378 = vmul.f32 %v1377, %v1377
        %v1379 = vsel %vm669, %v1378, 0.0
        %1380 = vadd.xlane.f32.xlu0 %v1379
        %v1381 = vpop.xlane.xlu0 %1380
        %v1382 = vmul.f32 %v1381, %v673
        %v1383 = vadd.f32 %v1382, 1e-12
        %v1384 = vrsqrt.pop %v1383
        %v1385 = vmul.f32 %v1377, %v1384
        %v1386 = vlaneseq
        %v1387 = vshrl.u32 %v1386, 7
        %v1388 = vsub.s32 0, %v1387
        %v1389 = vrot.slane %v1371, %v1388
        %v1390 = vmul.f32 %v1385, %v1389
        %v1391 = vlaneseq
        %v1392 = vshrl.u32 %v1391, 7
        %v1393 = vsub.s32 0, %v1392
        %v1394 = vrot.slane %v1372, %v1393
        %v1395 = vadd.f32 %v1390, %v1394
        %v1396 = vpack.c.bf16 %v1395, %v1395
        %s1397 = scalar_lea.vmem %s4, 48
        %v1398 = vld [vmem:[%s1397] sm:$0xf]
        %v1399 = vld [vmem:[%s1397 + $0x4] sm:$0xf]
        %v1400 = vld [vmem:[%s1397 + $0x8] sm:$0xf]
        %v1401 = vld [vmem:[%s1397 + $0xc] sm:$0xf]
        %s1402 = scalar_lea.vmem %s5, 4
        %v1403 = vld [vmem:[%s1402] sm:$0x1]
        %v1404 = vlaneseq
        %v1405 = vshrl.u32 %v1404, 7
        %v1406 = vsub.s32 0, %v1405
        %v1407 = vrot.slane %v1403, %v1406
        %v1412 = vunpack.c.l.b16 %v1398
        %v1413 = vunpack.c.l.b16 %v1399
        %v1414 = vunpack.c.l.b16 %v1400
        %v1415 = vunpack.c.l.b16 %v1401
        %v1416 = vpack.c.b16 %v1413, %v1412
        %v1417 = vpack.c.b16 %v1415, %v1414
        %v1421 = vsel %vm669, %v1396, 0
        %1423 = vmatprep.subr.bf16.mxu0 0
        %1424 = vmatpush1.bf16.msra.mxu0 0
        %1425 = vmatprep.subr.bf16.mxu0 0
        %1426 = vmatpush1.bf16.msra.mxu0 0
        %1427 = vmatprep.subr.bf16.mxu0 0
        %1428 = vmatpush1.bf16.msra.mxu0 0
        %1429 = vmatprep.subr.bf16.mxu0 0
        %1430 = vmatpush1.bf16.msra.mxu0 0
        %1431 = vmatprep.subr.bf16.mxu0 0
        %1432 = vmatpush1.bf16.msra.mxu0 0
        %1433 = vmatprep.subr.bf16.mxu0 0
        %1434 = vmatpush1.bf16.msra.mxu0 0
        %1435 = vmatprep.subr.bf16.mxu0 0
        %1436 = vmatpush1.bf16.msra.mxu0 %v1417
        %1437 = vmatprep.subr.bf16.mxu0 0
        %1438 = vmatpush1.bf16.msra.mxu0 %v1416
        %1439 = vmatprep.subr.bf16.mxu0 0
        %1440 = vmatpush2.bf16.msra.mxu0 0
        %1441 = vmatprep.subr.bf16.mxu0 0
        %1442 = vmatpush2.bf16.msra.mxu0 0
        %1443 = vmatprep.subr.bf16.mxu0 0
        %1444 = vmatpush2.bf16.msra.mxu0 0
        %1445 = vmatprep.subr.bf16.mxu0 0
        %1446 = vmatpush2.bf16.msra.mxu0 0
        %1447 = vmatprep.subr.bf16.mxu0 0
        %1448 = vmatpush2.bf16.msra.mxu0 0
        %1449 = vmatprep.subr.bf16.mxu0 0
        %1450 = vmatpush2.bf16.msra.mxu0 0
        %1451 = vmatprep.subr.bf16.mxu0 0
        %1452 = vmatpush2.bf16.msra.mxu0 0
        %1453 = vmatprep.subr.bf16.mxu0 0
        %1454 = vmatpush2.bf16.msra.mxu0 0
        %1455 = vmatprep.mubr.bf16.mxu0 0
        %1456 = vmatmul.mubr.bf16.gmra.mxu0 %v1421
        %v1457 = vpop.f32.mrf.mxu0
        %v1458 = vadd.f32 %v1407, %v1457
        %v1459 = vpop.f32.mrf.mxu0
        %v1460 = vpop.f32.mrf.mxu0
        %v1461 = vpop.f32.mrf.mxu0
        %1462 = vdwg.mxu0
        %s1463 = scalar_lea.vmem %s4, 64
        %v1464 = vld [vmem:[%s1463] sm:$0xf]
        %v1465 = vld [vmem:[%s1463 + $0x4] sm:$0xf]
        %v1466 = vld [vmem:[%s1463 + $0x8] sm:$0xf]
        %v1467 = vld [vmem:[%s1463 + $0xc] sm:$0xf]
        %v1468 = vld [vmem:[%s1402 + $0x1] sm:$0x1]
        %v1469 = vlaneseq
        %v1470 = vshrl.u32 %v1469, 7
        %v1471 = vsub.s32 0, %v1470
        %v1472 = vrot.slane %v1468, %v1471
        %v1477 = vunpack.c.l.b16 %v1464
        %v1478 = vunpack.c.l.b16 %v1465
        %v1479 = vunpack.c.l.b16 %v1466
        %v1480 = vunpack.c.l.b16 %v1467
        %v1481 = vpack.c.b16 %v1478, %v1477
        %v1482 = vpack.c.b16 %v1480, %v1479
        %1485 = vmatprep.subr.bf16.mxu0 0
        %1486 = vmatpush1.bf16.msra.mxu0 0
        %1487 = vmatprep.subr.bf16.mxu0 0
        %1488 = vmatpush1.bf16.msra.mxu0 0
        %1489 = vmatprep.subr.bf16.mxu0 0
        %1490 = vmatpush1.bf16.msra.mxu0 0
        %1491 = vmatprep.subr.bf16.mxu0 0
        %1492 = vmatpush1.bf16.msra.mxu0 0
        %1493 = vmatprep.subr.bf16.mxu0 0
        %1494 = vmatpush1.bf16.msra.mxu0 0
        %1495 = vmatprep.subr.bf16.mxu0 0
        %1496 = vmatpush1.bf16.msra.mxu0 0
        %1497 = vmatprep.subr.bf16.mxu0 0
        %1498 = vmatpush1.bf16.msra.mxu0 %v1482
        %1499 = vmatprep.subr.bf16.mxu0 0
        %1500 = vmatpush1.bf16.msra.mxu0 %v1481
        %1501 = vmatprep.subr.bf16.mxu0 0
        %1502 = vmatpush2.bf16.msra.mxu0 0
        %1503 = vmatprep.subr.bf16.mxu0 0
        %1504 = vmatpush2.bf16.msra.mxu0 0
        %1505 = vmatprep.subr.bf16.mxu0 0
        %1506 = vmatpush2.bf16.msra.mxu0 0
        %1507 = vmatprep.subr.bf16.mxu0 0
        %1508 = vmatpush2.bf16.msra.mxu0 0
        %1509 = vmatprep.subr.bf16.mxu0 0
        %1510 = vmatpush2.bf16.msra.mxu0 0
        %1511 = vmatprep.subr.bf16.mxu0 0
        %1512 = vmatpush2.bf16.msra.mxu0 0
        %1513 = vmatprep.subr.bf16.mxu0 0
        %1514 = vmatpush2.bf16.msra.mxu0 0
        %1515 = vmatprep.subr.bf16.mxu0 0
        %1516 = vmatpush2.bf16.msra.mxu0 0
        %1517 = vmatprep.mubr.bf16.mxu0 0
        %1518 = vmatmul.mubr.bf16.gmra.mxu0 %v1421
        %v1519 = vpop.f32.mrf.mxu0
        %v1520 = vadd.f32 %v1472, %v1519
        %v1521 = vpop.f32.mrf.mxu0
        %v1522 = vpop.f32.mrf.mxu0
        %v1523 = vpop.f32.mrf.mxu0
        %1524 = vdwg.mxu0
        %s1525 = scalar_lea.vmem %s4, 80
        %v1526 = vld [vmem:[%s1525] sm:$0xf]
        %v1527 = vld [vmem:[%s1525 + $0x4] sm:$0xf]
        %v1528 = vld [vmem:[%s1525 + $0x8] sm:$0xf]
        %v1529 = vld [vmem:[%s1525 + $0xc] sm:$0xf]
        %v1530 = vld [vmem:[%s1402 + $0x2] sm:$0x1]
        %v1531 = vlaneseq
        %v1532 = vshrl.u32 %v1531, 7
        %v1533 = vsub.s32 0, %v1532
        %v1534 = vrot.slane %v1530, %v1533
        %v1539 = vunpack.c.l.b16 %v1526
        %v1540 = vunpack.c.l.b16 %v1527
        %v1541 = vunpack.c.l.b16 %v1528
        %v1542 = vunpack.c.l.b16 %v1529
        %v1543 = vpack.c.b16 %v1540, %v1539
        %v1544 = vpack.c.b16 %v1542, %v1541
        %1547 = vmatprep.subr.bf16.mxu0 0
        %1548 = vmatpush1.bf16.msra.mxu0 0
        %1549 = vmatprep.subr.bf16.mxu0 0
        %1550 = vmatpush1.bf16.msra.mxu0 0
        %1551 = vmatprep.subr.bf16.mxu0 0
        %1552 = vmatpush1.bf16.msra.mxu0 0
        %1553 = vmatprep.subr.bf16.mxu0 0
        %1554 = vmatpush1.bf16.msra.mxu0 0
        %1555 = vmatprep.subr.bf16.mxu0 0
        %1556 = vmatpush1.bf16.msra.mxu0 0
        %1557 = vmatprep.subr.bf16.mxu0 0
        %1558 = vmatpush1.bf16.msra.mxu0 0
        %1559 = vmatprep.subr.bf16.mxu0 0
        %1560 = vmatpush1.bf16.msra.mxu0 %v1544
        %1561 = vmatprep.subr.bf16.mxu0 0
        %1562 = vmatpush1.bf16.msra.mxu0 %v1543
        %1563 = vmatprep.subr.bf16.mxu0 0
        %1564 = vmatpush2.bf16.msra.mxu0 0
        %1565 = vmatprep.subr.bf16.mxu0 0
        %1566 = vmatpush2.bf16.msra.mxu0 0
        %1567 = vmatprep.subr.bf16.mxu0 0
        %1568 = vmatpush2.bf16.msra.mxu0 0
        %1569 = vmatprep.subr.bf16.mxu0 0
        %1570 = vmatpush2.bf16.msra.mxu0 0
        %1571 = vmatprep.subr.bf16.mxu0 0
        %1572 = vmatpush2.bf16.msra.mxu0 0
        %1573 = vmatprep.subr.bf16.mxu0 0
        %1574 = vmatpush2.bf16.msra.mxu0 0
        %1575 = vmatprep.subr.bf16.mxu0 0
        %1576 = vmatpush2.bf16.msra.mxu0 0
        %1577 = vmatprep.subr.bf16.mxu0 0
        %1578 = vmatpush2.bf16.msra.mxu0 0
        %1579 = vmatprep.mubr.bf16.mxu0 0
        %1580 = vmatmul.mubr.bf16.gmra.mxu0 %v1421
        %v1581 = vpop.f32.mrf.mxu0
        %v1582 = vadd.f32 %v1534, %v1581
        %v1583 = vpop.f32.mrf.mxu0
        %v1584 = vpop.f32.mrf.mxu0
        %v1585 = vpop.f32.mrf.mxu0
        %1586 = vdwg.mxu0
        %v1587 = vpack.c.bf16 %v1520, %v1520
        %v1588 = vmul.f32 %v1458, %v892
        %v1589 = vpack.c.bf16 %v1588, %v1588
        %v1591 = vsel %vm669, %v1589, 0
        %v1594 = vsel %vm669, %v1587, 0
        %1596 = vmatprep.subr.bf16.mxu0 0
        %1597 = vmatpush1.bf16.xpose.msra.mxu0 0
        %1598 = vmatprep.subr.bf16.mxu0 0
        %1599 = vmatpush1.bf16.xpose.msra.mxu0 0
        %1600 = vmatprep.subr.bf16.mxu0 0
        %1601 = vmatpush1.bf16.xpose.msra.mxu0 0
        %1602 = vmatprep.subr.bf16.mxu0 0
        %1603 = vmatpush1.bf16.xpose.msra.mxu0 0
        %1604 = vmatprep.subr.bf16.mxu0 0
        %1605 = vmatpush1.bf16.xpose.msra.mxu0 0
        %1606 = vmatprep.subr.bf16.mxu0 0
        %1607 = vmatpush1.bf16.xpose.msra.mxu0 0
        %1608 = vmatprep.subr.bf16.mxu0 0
        %1609 = vmatpush1.bf16.xpose.msra.mxu0 0
        %1610 = vmatprep.subr.bf16.mxu0 0
        %1611 = vmatpush1.bf16.xpose.msra.mxu0 %v1594
        %1612 = vmatprep.subr.bf16.mxu0 0
        %1613 = vmatpush2.bf16.xpose.msra.mxu0 0
        %1614 = vmatprep.subr.bf16.mxu0 0
        %1615 = vmatpush2.bf16.xpose.msra.mxu0 0
        %1616 = vmatprep.subr.bf16.mxu0 0
        %1617 = vmatpush2.bf16.xpose.msra.mxu0 0
        %1618 = vmatprep.subr.bf16.mxu0 0
        %1619 = vmatpush2.bf16.xpose.msra.mxu0 0
        %1620 = vmatprep.subr.bf16.mxu0 0
        %1621 = vmatpush2.bf16.xpose.msra.mxu0 0
        %1622 = vmatprep.subr.bf16.mxu0 0
        %1623 = vmatpush2.bf16.xpose.msra.mxu0 0
        %1624 = vmatprep.subr.bf16.mxu0 0
        %1625 = vmatpush2.bf16.xpose.msra.mxu0 0
        %1626 = vmatprep.subr.bf16.mxu0 0
        %1627 = vmatpush2.bf16.xpose.msra.mxu0 0
        %1628 = vmatprep.mubr.bf16.mxu0 0
        %1629 = vmatmul.mubr.bf16.gmra.mxu0 %v1591
        %v1630 = vpop.f32.mrf.mxu0
        %v1631 = vadd.f32 0.0, %v1630
        %v1632 = vpop.f32.mrf.mxu0
        %v1633 = vpop.f32.mrf.mxu0
        %v1634 = vpop.f32.mrf.mxu0
        %1635 = vdwg.mxu0
        %v1636 = vmul.f32 %v1631, 0.25
        %v1637 = vadd.f32 %v1636, %v946
        %v1638 = vsel %vm949, %v1637, -inf
        %1639 = vmax.xlane.f32.xlu0 %v1638
        %v1640 = vpop.xlane.xlu0 %1639
        %v1641 = vsub.f32 %v1637, %v1640
        %v1642 = vmul.f32 %v1641, 1.442695
        %v1643 = vpow.pop %v1642
        %v1644 = vsel %vm949, %v1643, 0.0
        %1645 = vadd.xlane.f32.xlu0 %v1644
        %v1646 = vpop.xlane.xlu0 %1645
        %v1647 = vrcp.pop %v1646
        %v1648 = vmul.f32 %v1643, %v1647
        %v1649 = vmul.f32 %v1582, %v892
        %v1650 = vpack.c.bf16 %v1649, %v1649
        %v1651 = vpack.c.bf16 %v1648, %v1648
        %v1652 = vmul.f32 %v1458, %v968
        %v1653 = vpack.c.bf16 %v1652, %v1652
        %v1655 = vsel %vm669, %v1653, 0
        %1657 = vmatprep.subr.bf16.mxu0 0
        %1658 = vmatpush1.bf16.xpose.msra.mxu0 0
        %1659 = vmatprep.subr.bf16.mxu0 0
        %1660 = vmatpush1.bf16.xpose.msra.mxu0 0
        %1661 = vmatprep.subr.bf16.mxu0 0
        %1662 = vmatpush1.bf16.xpose.msra.mxu0 0
        %1663 = vmatprep.subr.bf16.mxu0 0
        %1664 = vmatpush1.bf16.xpose.msra.mxu0 0
        %1665 = vmatprep.subr.bf16.mxu0 0
        %1666 = vmatpush1.bf16.xpose.msra.mxu0 0
        %1667 = vmatprep.subr.bf16.mxu0 0
        %1668 = vmatpush1.bf16.xpose.msra.mxu0 0
        %1669 = vmatprep.subr.bf16.mxu0 0
        %1670 = vmatpush1.bf16.xpose.msra.mxu0 0
        %1671 = vmatprep.subr.bf16.mxu0 0
        %1672 = vmatpush1.bf16.xpose.msra.mxu0 %v1594
        %1673 = vmatprep.subr.bf16.mxu0 0
        %1674 = vmatpush2.bf16.xpose.msra.mxu0 0
        %1675 = vmatprep.subr.bf16.mxu0 0
        %1676 = vmatpush2.bf16.xpose.msra.mxu0 0
        %1677 = vmatprep.subr.bf16.mxu0 0
        %1678 = vmatpush2.bf16.xpose.msra.mxu0 0
        %1679 = vmatprep.subr.bf16.mxu0 0
        %1680 = vmatpush2.bf16.xpose.msra.mxu0 0
        %1681 = vmatprep.subr.bf16.mxu0 0
        %1682 = vmatpush2.bf16.xpose.msra.mxu0 0
        %1683 = vmatprep.subr.bf16.mxu0 0
        %1684 = vmatpush2.bf16.xpose.msra.mxu0 0
        %1685 = vmatprep.subr.bf16.mxu0 0
        %1686 = vmatpush2.bf16.xpose.msra.mxu0 0
        %1687 = vmatprep.subr.bf16.mxu0 0
        %1688 = vmatpush2.bf16.xpose.msra.mxu0 0
        %1689 = vmatprep.mubr.bf16.mxu0 0
        %1690 = vmatmul.mubr.bf16.gmra.mxu0 %v1655
        %v1691 = vpop.f32.mrf.mxu0
        %v1692 = vadd.f32 0.0, %v1691
        %v1693 = vpop.f32.mrf.mxu0
        %v1694 = vpop.f32.mrf.mxu0
        %v1695 = vpop.f32.mrf.mxu0
        %1696 = vdwg.mxu0
        %v1697 = vmul.f32 %v1692, 0.25
        %v1698 = vadd.f32 %v1697, %v946
        %v1699 = vsel %vm949, %v1698, -inf
        %1700 = vmax.xlane.f32.xlu0 %v1699
        %v1701 = vpop.xlane.xlu0 %1700
        %v1702 = vsub.f32 %v1698, %v1701
        %v1703 = vmul.f32 %v1702, 1.442695
        %v1704 = vpow.pop %v1703
        %v1705 = vsel %vm949, %v1704, 0.0
        %1706 = vadd.xlane.f32.xlu0 %v1705
        %v1707 = vpop.xlane.xlu0 %1706
        %v1708 = vrcp.pop %v1707
        %v1709 = vmul.f32 %v1704, %v1708
        %v1710 = vmul.f32 %v1582, %v968
        %v1711 = vpack.c.bf16 %v1710, %v1710
        %v1712 = vpack.c.bf16 %v1709, %v1709
        %v1714 = vsel %vm949, %v1712, 0
        %v1717 = vsel %vm1033, %v1711, 0
        %1719 = vmatprep.subr.bf16.mxu0 0
        %1720 = vmatpush1.bf16.msra.mxu0 0
        %1721 = vmatprep.subr.bf16.mxu0 0
        %1722 = vmatpush1.bf16.msra.mxu0 0
        %1723 = vmatprep.subr.bf16.mxu0 0
        %1724 = vmatpush1.bf16.msra.mxu0 0
        %1725 = vmatprep.subr.bf16.mxu0 0
        %1726 = vmatpush1.bf16.msra.mxu0 0
        %1727 = vmatprep.subr.bf16.mxu0 0
        %1728 = vmatpush1.bf16.msra.mxu0 0
        %1729 = vmatprep.subr.bf16.mxu0 0
        %1730 = vmatpush1.bf16.msra.mxu0 0
        %1731 = vmatprep.subr.bf16.mxu0 0
        %1732 = vmatpush1.bf16.msra.mxu0 0
        %1733 = vmatprep.subr.bf16.mxu0 0
        %1734 = vmatpush1.bf16.msra.mxu0 %v1717
        %1735 = vmatprep.subr.bf16.mxu0 0
        %1736 = vmatpush2.bf16.msra.mxu0 0
        %1737 = vmatprep.subr.bf16.mxu0 0
        %1738 = vmatpush2.bf16.msra.mxu0 0
        %1739 = vmatprep.subr.bf16.mxu0 0
        %1740 = vmatpush2.bf16.msra.mxu0 0
        %1741 = vmatprep.subr.bf16.mxu0 0
        %1742 = vmatpush2.bf16.msra.mxu0 0
        %1743 = vmatprep.subr.bf16.mxu0 0
        %1744 = vmatpush2.bf16.msra.mxu0 0
        %1745 = vmatprep.subr.bf16.mxu0 0
        %1746 = vmatpush2.bf16.msra.mxu0 0
        %1747 = vmatprep.subr.bf16.mxu0 0
        %1748 = vmatpush2.bf16.msra.mxu0 0
        %1749 = vmatprep.subr.bf16.mxu0 0
        %1750 = vmatpush2.bf16.msra.mxu0 0
        %1751 = vmatprep.mubr.bf16.mxu0 0
        %1752 = vmatmul.mubr.bf16.gmra.mxu0 %v1714
        %v1753 = vpop.f32.mrf.mxu0
        %v1754 = vadd.f32 0.0, %v1753
        %v1755 = vpop.f32.mrf.mxu0
        %v1756 = vpop.f32.mrf.mxu0
        %v1757 = vpop.f32.mrf.mxu0
        %1758 = vdwg.mxu0
        %v1760 = vsel %vm949, %v1651, 0
        %v1763 = vsel %vm1033, %v1650, 0
        %1765 = vmatprep.subr.bf16.mxu0 0
        %1766 = vmatpush1.bf16.msra.mxu0 0
        %1767 = vmatprep.subr.bf16.mxu0 0
        %1768 = vmatpush1.bf16.msra.mxu0 0
        %1769 = vmatprep.subr.bf16.mxu0 0
        %1770 = vmatpush1.bf16.msra.mxu0 0
        %1771 = vmatprep.subr.bf16.mxu0 0
        %1772 = vmatpush1.bf16.msra.mxu0 0
        %1773 = vmatprep.subr.bf16.mxu0 0
        %1774 = vmatpush1.bf16.msra.mxu0 0
        %1775 = vmatprep.subr.bf16.mxu0 0
        %1776 = vmatpush1.bf16.msra.mxu0 0
        %1777 = vmatprep.subr.bf16.mxu0 0
        %1778 = vmatpush1.bf16.msra.mxu0 0
        %1779 = vmatprep.subr.bf16.mxu0 0
        %1780 = vmatpush1.bf16.msra.mxu0 %v1763
        %1781 = vmatprep.subr.bf16.mxu0 0
        %1782 = vmatpush2.bf16.msra.mxu0 0
        %1783 = vmatprep.subr.bf16.mxu0 0
        %1784 = vmatpush2.bf16.msra.mxu0 0
        %1785 = vmatprep.subr.bf16.mxu0 0
        %1786 = vmatpush2.bf16.msra.mxu0 0
        %1787 = vmatprep.subr.bf16.mxu0 0
        %1788 = vmatpush2.bf16.msra.mxu0 0
        %1789 = vmatprep.subr.bf16.mxu0 0
        %1790 = vmatpush2.bf16.msra.mxu0 0
        %1791 = vmatprep.subr.bf16.mxu0 0
        %1792 = vmatpush2.bf16.msra.mxu0 0
        %1793 = vmatprep.subr.bf16.mxu0 0
        %1794 = vmatpush2.bf16.msra.mxu0 0
        %1795 = vmatprep.subr.bf16.mxu0 0
        %1796 = vmatpush2.bf16.msra.mxu0 0
        %1797 = vmatprep.mubr.bf16.mxu0 0
        %1798 = vmatmul.mubr.bf16.gmra.mxu0 %v1760
        %v1799 = vpop.f32.mrf.mxu0
        %v1800 = vadd.f32 %v1754, %v1799
        %v1801 = vpop.f32.mrf.mxu0
        %v1802 = vpop.f32.mrf.mxu0
        %v1803 = vpop.f32.mrf.mxu0
        %1804 = vdwg.mxu0
        %v1805 = vpack.c.bf16 %v1800, %v1800
        %s1806 = scalar_lea.vmem [#allocation10], 16
        %v1807 = vld [vmem:[%s1806] sm:$0xf]
        %v1808 = vld [vmem:[%s1806 + $0x4] sm:$0xf]
        %v1809 = vld [vmem:[%s1806 + $0x8] sm:$0xf]
        %v1810 = vld [vmem:[%s1806 + $0xc] sm:$0xf]
        %v1811 = vld [vmem:[#allocation11 + $0x1] sm:$0x1]
        %v1812 = vlaneseq
        %v1813 = vshrl.u32 %v1812, 7
        %v1814 = vsub.s32 0, %v1813
        %v1815 = vrot.slane %v1811, %v1814
        %v1820 = vunpack.c.l.b16 %v1807
        %v1821 = vunpack.c.l.b16 %v1808
        %v1822 = vunpack.c.l.b16 %v1809
        %v1823 = vunpack.c.l.b16 %v1810
        %v1824 = vpack.c.b16 %v1821, %v1820
        %v1825 = vpack.c.b16 %v1823, %v1822
        %v1829 = vsel %vm669, %v1805, 0
        %1831 = vmatprep.subr.bf16.mxu0 0
        %1832 = vmatpush1.bf16.msra.mxu0 0
        %1833 = vmatprep.subr.bf16.mxu0 0
        %1834 = vmatpush1.bf16.msra.mxu0 0
        %1835 = vmatprep.subr.bf16.mxu0 0
        %1836 = vmatpush1.bf16.msra.mxu0 0
        %1837 = vmatprep.subr.bf16.mxu0 0
        %1838 = vmatpush1.bf16.msra.mxu0 0
        %1839 = vmatprep.subr.bf16.mxu0 0
        %1840 = vmatpush1.bf16.msra.mxu0 0
        %1841 = vmatprep.subr.bf16.mxu0 0
        %1842 = vmatpush1.bf16.msra.mxu0 0
        %1843 = vmatprep.subr.bf16.mxu0 0
        %1844 = vmatpush1.bf16.msra.mxu0 %v1825
        %1845 = vmatprep.subr.bf16.mxu0 0
        %1846 = vmatpush1.bf16.msra.mxu0 %v1824
        %1847 = vmatprep.subr.bf16.mxu0 0
        %1848 = vmatpush2.bf16.msra.mxu0 0
        %1849 = vmatprep.subr.bf16.mxu0 0
        %1850 = vmatpush2.bf16.msra.mxu0 0
        %1851 = vmatprep.subr.bf16.mxu0 0
        %1852 = vmatpush2.bf16.msra.mxu0 0
        %1853 = vmatprep.subr.bf16.mxu0 0
        %1854 = vmatpush2.bf16.msra.mxu0 0
        %1855 = vmatprep.subr.bf16.mxu0 0
        %1856 = vmatpush2.bf16.msra.mxu0 0
        %1857 = vmatprep.subr.bf16.mxu0 0
        %1858 = vmatpush2.bf16.msra.mxu0 0
        %1859 = vmatprep.subr.bf16.mxu0 0
        %1860 = vmatpush2.bf16.msra.mxu0 0
        %1861 = vmatprep.subr.bf16.mxu0 0
        %1862 = vmatpush2.bf16.msra.mxu0 0
        %1863 = vmatprep.mubr.bf16.mxu0 0
        %1864 = vmatmul.mubr.bf16.gmra.mxu0 %v1829
        %v1865 = vpop.f32.mrf.mxu0
        %v1866 = vadd.f32 %v1815, %v1865
        %v1867 = vpop.f32.mrf.mxu0
        %v1868 = vpop.f32.mrf.mxu0
        %v1869 = vpop.f32.mrf.mxu0
        %1870 = vdwg.mxu0
        %v1871 = vadd.f32 %v1395, %v1866
        %v1872 = vld [vmem:[#allocation16 + $0x1] sm:$0x1]
        %v1873 = vld [vmem:[%s13 + $0x1] sm:$0x1]
        %v1874 = vsel %vm669, %v1871, 0.0
        %1875 = vadd.xlane.f32.xlu0 %v1874
        %v1876 = vpop.xlane.xlu0 %1875
        %v1877 = vmul.f32 %v1876, %v673
        %v1878 = vsub.f32 %v1871, %v1877
        %v1879 = vmul.f32 %v1878, %v1878
        %v1880 = vsel %vm669, %v1879, 0.0
        %1881 = vadd.xlane.f32.xlu0 %v1880
        %v1882 = vpop.xlane.xlu0 %1881
        %v1883 = vmul.f32 %v1882, %v673
        %v1884 = vadd.f32 %v1883, 1e-12
        %v1885 = vrsqrt.pop %v1884
        %v1886 = vmul.f32 %v1878, %v1885
        %v1887 = vlaneseq
        %v1888 = vshrl.u32 %v1887, 7
        %v1889 = vsub.s32 0, %v1888
        %v1890 = vrot.slane %v1872, %v1889
        %v1891 = vmul.f32 %v1886, %v1890
        %v1892 = vlaneseq
        %v1893 = vshrl.u32 %v1892, 7
        %v1894 = vsub.s32 0, %v1893
        %v1895 = vrot.slane %v1873, %v1894
        %v1896 = vadd.f32 %v1891, %v1895
        %v1897 = vpack.c.bf16 %v1896, %v1896
        %s1898 = scalar_lea.vmem [#allocation13], 16
        %v1899 = vld [vmem:[%s1898] sm:$0xf]
        %v1900 = vld [vmem:[%s1898 + $0x4] sm:$0xf]
        %v1901 = vld [vmem:[%s1898 + $0x8] sm:$0xf]
        %v1902 = vld [vmem:[%s1898 + $0xc] sm:$0xf]
        %v1903 = vld [vmem:[#allocation14 + $0x1] sm:$0x1]
        %v1904 = vlaneseq
        %v1905 = vshrl.u32 %v1904, 7
        %v1906 = vsub.s32 0, %v1905
        %v1907 = vrot.slane %v1903, %v1906
        %v1912 = vunpack.c.l.b16 %v1899
        %v1913 = vunpack.c.l.b16 %v1900
        %v1914 = vunpack.c.l.b16 %v1901
        %v1915 = vunpack.c.l.b16 %v1902
        %v1916 = vpack.c.b16 %v1913, %v1912
        %v1917 = vpack.c.b16 %v1915, %v1914
        %v1921 = vsel %vm669, %v1897, 0
        %1923 = vmatprep.subr.bf16.mxu0 0
        %1924 = vmatpush1.bf16.msra.mxu0 0
        %1925 = vmatprep.subr.bf16.mxu0 0
        %1926 = vmatpush1.bf16.msra.mxu0 0
        %1927 = vmatprep.subr.bf16.mxu0 0
        %1928 = vmatpush1.bf16.msra.mxu0 0
        %1929 = vmatprep.subr.bf16.mxu0 0
        %1930 = vmatpush1.bf16.msra.mxu0 0
        %1931 = vmatprep.subr.bf16.mxu0 0
        %1932 = vmatpush1.bf16.msra.mxu0 0
        %1933 = vmatprep.subr.bf16.mxu0 0
        %1934 = vmatpush1.bf16.msra.mxu0 0
        %1935 = vmatprep.subr.bf16.mxu0 0
        %1936 = vmatpush1.bf16.msra.mxu0 %v1917
        %1937 = vmatprep.subr.bf16.mxu0 0
        %1938 = vmatpush1.bf16.msra.mxu0 %v1916
        %1939 = vmatprep.subr.bf16.mxu0 0
        %1940 = vmatpush2.bf16.msra.mxu0 0
        %1941 = vmatprep.subr.bf16.mxu0 0
        %1942 = vmatpush2.bf16.msra.mxu0 0
        %1943 = vmatprep.subr.bf16.mxu0 0
        %1944 = vmatpush2.bf16.msra.mxu0 0
        %1945 = vmatprep.subr.bf16.mxu0 0
        %1946 = vmatpush2.bf16.msra.mxu0 0
        %1947 = vmatprep.subr.bf16.mxu0 0
        %1948 = vmatpush2.bf16.msra.mxu0 0
        %1949 = vmatprep.subr.bf16.mxu0 0
        %1950 = vmatpush2.bf16.msra.mxu0 0
        %1951 = vmatprep.subr.bf16.mxu0 0
        %1952 = vmatpush2.bf16.msra.mxu0 0
        %1953 = vmatprep.subr.bf16.mxu0 0
        %1954 = vmatpush2.bf16.msra.mxu0 0
        %1955 = vmatprep.mubr.bf16.mxu0 0
        %1956 = vmatmul.mubr.bf16.gmra.mxu0 %v1921
        %v1957 = vpop.f32.mrf.mxu0
        %v1958 = vadd.f32 %v1907, %v1957
        %v1959 = vpop.f32.mrf.mxu0
        %v1960 = vpop.f32.mrf.mxu0
        %v1961 = vpop.f32.mrf.mxu0
        %1962 = vdwg.mxu0
        %v1963 = vmul.f32 %v1958, %v1958
        %v1964 = vmul.f32 %v1958, %v1963
        %v1965 = vmul.f32 %v1964, 0.044715
        %v1966 = vadd.f32 %v1958, %v1965
        %v1967 = vmul.f32 %v1966, 0.7978846
        %v1968 = vtanh.pop %v1967
        %v1969 = vadd.f32 %v1968, 1.0
        %v1970 = vmul.f32 %v1969, 0.5
        %v1971 = vmul.f32 %v1958, %v1970
        %v1972 = vpack.c.bf16 %v1971, %v1971
        %s1973 = scalar_lea.vmem %s10, 32
        %v1974 = vld [vmem:[%s1973] sm:$0xf]
        %v1975 = vld [vmem:[%s1973 + $0x4] sm:$0xf]
        %v1976 = vld [vmem:[%s1973 + $0x8] sm:$0xf]
        %v1977 = vld [vmem:[%s1973 + $0xc] sm:$0xf]
        %v1978 = vld [vmem:[%s1973 + $0x10] sm:$0xf]
        %v1979 = vld [vmem:[%s1973 + $0x14] sm:$0xf]
        %v1980 = vld [vmem:[%s1973 + $0x18] sm:$0xf]
        %v1981 = vld [vmem:[%s1973 + $0x1c] sm:$0xf]
        %v1982 = vld [vmem:[%s11 + $0x1] sm:$0x1]
        %v1983 = vlaneseq
        %v1984 = vshrl.u32 %v1983, 7
        %v1985 = vsub.s32 0, %v1984
        %v1986 = vrot.slane %v1982, %v1985
        %v1995 = vunpack.c.l.b16 %v1974
        %v1996 = vunpack.c.l.b16 %v1975
        %v1997 = vunpack.c.l.b16 %v1976
        %v1998 = vunpack.c.l.b16 %v1977
        %v1999 = vunpack.c.l.b16 %v1978
        %v2000 = vunpack.c.l.b16 %v1979
        %v2001 = vunpack.c.l.b16 %v1980
        %v2002 = vunpack.c.l.b16 %v1981
        %v2003 = vpack.c.b16 %v1996, %v1995
        %v2004 = vpack.c.b16 %v1998, %v1997
        %v2005 = vpack.c.b16 %v2000, %v1999
        %v2006 = vpack.c.b16 %v2002, %v2001
        %v2012 = vsel %vm1326, %v1972, 0
        %2014 = vmatprep.subr.bf16.mxu0 0
        %2015 = vmatpush1.bf16.msra.mxu0 0
        %2016 = vmatprep.subr.bf16.mxu0 0
        %2017 = vmatpush1.bf16.msra.mxu0 0
        %2018 = vmatprep.subr.bf16.mxu0 0
        %2019 = vmatpush1.bf16.msra.mxu0 0
        %2020 = vmatprep.subr.bf16.mxu0 0
        %2021 = vmatpush1.bf16.msra.mxu0 0
        %2022 = vmatprep.subr.bf16.mxu0 0
        %2023 = vmatpush1.bf16.msra.mxu0 %v2006
        %2024 = vmatprep.subr.bf16.mxu0 0
        %2025 = vmatpush1.bf16.msra.mxu0 %v2005
        %2026 = vmatprep.subr.bf16.mxu0 0
        %2027 = vmatpush1.bf16.msra.mxu0 %v2004
        %2028 = vmatprep.subr.bf16.mxu0 0
        %2029 = vmatpush1.bf16.msra.mxu0 %v2003
        %2030 = vmatprep.subr.bf16.mxu0 0
        %2031 = vmatpush2.bf16.msra.mxu0 0
        %2032 = vmatprep.subr.bf16.mxu0 0
        %2033 = vmatpush2.bf16.msra.mxu0 0
        %2034 = vmatprep.subr.bf16.mxu0 0
        %2035 = vmatpush2.bf16.msra.mxu0 0
        %2036 = vmatprep.subr.bf16.mxu0 0
        %2037 = vmatpush2.bf16.msra.mxu0 0
        %2038 = vmatprep.subr.bf16.mxu0 0
        %2039 = vmatpush2.bf16.msra.mxu0 0
        %2040 = vmatprep.subr.bf16.mxu0 0
        %2041 = vmatpush2.bf16.msra.mxu0 0
        %2042 = vmatprep.subr.bf16.mxu0 0
        %2043 = vmatpush2.bf16.msra.mxu0 0
        %2044 = vmatprep.subr.bf16.mxu0 0
        %2045 = vmatpush2.bf16.msra.mxu0 0
        %2046 = vmatprep.mubr.bf16.mxu0 0
        %2047 = vmatmul.mubr.bf16.gmra.mxu0 %v2012
        %v2048 = vpop.f32.mrf.mxu0
        %v2049 = vadd.f32 %v1986, %v2048
        %v2050 = vpop.f32.mrf.mxu0
        %v2051 = vpop.f32.mrf.mxu0
        %v2052 = vpop.f32.mrf.mxu0
        %2053 = vdwg.mxu0
        %v2054 = vadd.f32 %v1896, %v2049
        %v2055 = vld [vmem:[%s14 + $0x1] sm:$0x1]
        %v2056 = vld [vmem:[%s15 + $0x1] sm:$0x1]
        %v2057 = vsel %vm669, %v2054, 0.0
        %2058 = vadd.xlane.f32.xlu0 %v2057
        %v2059 = vpop.xlane.xlu0 %2058
        %v2060 = vmul.f32 %v2059, %v673
        %v2061 = vsub.f32 %v2054, %v2060
        %v2062 = vmul.f32 %v2061, %v2061
        %v2063 = vsel %vm669, %v2062, 0.0
        %2064 = vadd.xlane.f32.xlu0 %v2063
        %v2065 = vpop.xlane.xlu0 %2064
        %v2066 = vmul.f32 %v2065, %v673
        %v2067 = vadd.f32 %v2066, 1e-12
        %v2068 = vrsqrt.pop %v2067
        %v2069 = vmul.f32 %v2061, %v2068
        %v2070 = vlaneseq
        %v2071 = vshrl.u32 %v2070, 7
        %v2072 = vsub.s32 0, %v2071
        %v2073 = vrot.slane %v2055, %v2072
        %v2074 = vmul.f32 %v2069, %v2073
        %v2075 = vlaneseq
        %v2076 = vshrl.u32 %v2075, 7
        %v2077 = vsub.s32 0, %v2076
        %v2078 = vrot.slane %v2056, %v2077
        %v2079 = vadd.f32 %v2074, %v2078
        %2080 = vst.msk [vmem:[%s661] sm:$0xff] %vm669, %v2079
        %s2081 = sand.u32 %s393, 1
        %s2082 = scalar_lea.sflag [#allocation4], %s2081
        %s2083 = sand.u32 %s393, 1
        %s2084 = smul.addr %s2083, 8
        %s2085 = scalar_lea.vmem [#allocation17], %s2084
        // Predicated region
        $region121: #{tpu_custom_call.1} parent=83 // pred_check
          %p2086 = pneg %p403
        $region122: #{tpu_custom_call.1} parent=83 // pred_check_branch
          %2088 = sbr.rel (%p2086) target = $region124
        $region123: #{tpu_custom_call.1} parent=83 // pred_region
          %s2090 = ssub.s32 128, 128
          %2091 = vsyncadd %s2082, %s2090
          %s2092 = smul.addr %s39, 128
          %s2093 = scalar_lea.hbm %s16, %s2092
          %s2095 = sshll.u32 %s2085, 4
          %s2096 = int_to_ptr.vmem [resolvable:$true] %s2095
          %2098 = dma.vmem_to_hbm [thread:$0]  %s2096, 128, %s2093, %s2082
        $region124: #{tpu_custom_call.1} parent=83 // pred_fallthru
          _
      $region84: #{tpu_custom_call.1} parent=5 // pred_fallthru
        _
      %p2099 = scmp.le.s32.totalorder 2, %s34
      // Predicated region
      $region125: #{tpu_custom_call.1} parent=5 // pred_check
        %p2100 = pneg %p2099
      $region126: #{tpu_custom_call.1} parent=5 // pred_check_branch
        %2102 = sbr.rel (%p2100) target = $region128
      $region127: #{tpu_custom_call.1} parent=5 // pred_region
        %s2103 = ssub.s32 %s34, 2
        // Predicated region
        $region129: #{tpu_custom_call.1} parent=127 // pred_check
          %p2104 = pneg %p409
        $region130: #{tpu_custom_call.1} parent=127 // pred_check_branch
          %2106 = sbr.rel (%p2104) target = $region132
        $region131: #{tpu_custom_call.1} parent=127 // pred_region
          %s2107 = sand.u32 %s394, 1
          %s2108 = scalar_lea.sflag [#allocation4], %s2107
          %s2109 = sand.u32 %s394, 1
          %s2110 = smul.addr %s2109, 8
          %s2111 = scalar_lea.vmem [#allocation17], %s2110
          %2112 = dma.done %s2108, 128
        $region132: #{tpu_custom_call.1} parent=127 // pred_fallthru
          _
      $region128: #{tpu_custom_call.1} parent=5 // pred_fallthru
        _
    $region6: #{tpu_custom_call.1} parent=1 // loop_footer
      %s38 = sadd.s32 1, %s34
    $region7: #{tpu_custom_call.1} parent=1 // loop_footer_branch
      %33 = sbr.rel target = $region3
    $region8: #{tpu_custom_call.1} parent=1 // loop_exit
      _
    %2113 = vsyncpa [#allocation3], 1
    %s2114 = scalar_lea.sflag [#allocation3], 1
    %2115 = vsyncpa %s2114, 1
    %2116 = vsyncpa [#allocation6], 1
    %s2117 = scalar_lea.sflag [#allocation6], 1
    %2118 = vsyncpa %s2117, 1
    %2119 = vsyncpa [#allocation9], 1
    %2120 = vsyncpa [#allocation12], 1
    %2121 = vsyncpa [#allocation15], 1
    %2122 = vsyncpa [#allocation4], 1
    %s2123 = scalar_lea.sflag [#allocation4], 1
    %2124 = vsyncpa %s2123, 1

</llo_original>
